<compile_context>
chip_gen: v7x
topology: tpu7x:2x2x1
jax: 0.10.0
libtpu: 0.0.40
codegen_flags: <defaults>
</compile_context>

<pallas_src>
import functools

import jax
import jax.numpy as jnp
from jax import lax
from jax.experimental import pallas as pl
from jax.experimental.pallas import tpu as pltpu


BP = 8  # sublane-aligned batch padding inside the kernel


def lstm_kernel(x_ref, wih_ref, whh_ref, b_ref, we_ref, wo_ref, out_ref, *,
                emb_col):
    TB, _ = x_ref.shape
    Hp, _ = whh_ref.shape          # lane-padded hidden size (multiple of 128)
    Bp = out_ref.shape[0]
    T = TB // Bp

    # ---- hoisted input projection: one MXU matmul for all T*Bp rows --------
    # t-major rows (row r = t*Bp + b), bf16 operands, f32 accumulate + bias.
    x_proj = (jnp.dot(x_ref[...], wih_ref[...],
                      preferred_element_type=jnp.float32)
              + b_ref[...])                                   # (T*Bp, 4*Hp) f32

    h = jnp.zeros((Bp, Hp), jnp.float32)
    c = jnp.zeros((Bp, Hp), jnp.float32)

    def sig(v):
        # single EUP push + 2 VPU ops (vs. exp + add + full divide)
        return 0.5 * jnp.tanh(0.5 * v) + 0.5

    # ---- recurrence: fully unrolled static loop, h/c carried in vregs ------
    # Only the true sequential dependency (h @ W_hh) lives inside the loop.
    for t in range(T):
        gates = x_proj[t * Bp:(t + 1) * Bp, :] + jnp.dot(
            h.astype(jnp.bfloat16), whh_ref[...],
            preferred_element_type=jnp.float32)               # (Bp, 4*Hp) f32
        # PyTorch gate order [i, f, g, o]; each slice is a 128-lane tile.
        i_g = sig(gates[:, 0 * Hp:1 * Hp])
        f_g = sig(gates[:, 1 * Hp:2 * Hp])
        g_g = jnp.tanh(gates[:, 2 * Hp:3 * Hp])
        o_g = sig(gates[:, 3 * Hp:4 * Hp])
        c = f_g * c + i_g * g_g
        h = o_g * jnp.tanh(c)

    # ---- heads on the last hidden state (f32, off the critical path) -------
    # Force lane Hp-1 of h to 1 so the last row of we_ref contributes
    # fc_embed's bias, and emb_full[:, Dp-1] becomes a constant-1 column that
    # carries fc_out's bias through the lane reduction below.
    Dp = we_ref.shape[1]
    lane_h = lax.broadcasted_iota(jnp.int32, (Bp, Hp), 1)
    h_head = jnp.where(lane_h == Hp - 1, 1.0, h)
    emb_full = jnp.dot(h_head, we_ref[...],
                       preferred_element_type=jnp.float32)    # (Bp, Dp)

    # fc_out (output_size == 1): VPU/XLU lane reduction, b_o folded into
    # wo_ref lane Dp-1 (multiplies the constant-1 column).
    out_col = jnp.sum(emb_full * wo_ref[...], axis=-1, keepdims=True)  # (Bp,1)

    # Pack emb (lanes < E) and out (lane == emb_col) into one full-lane slab:
    # single unmasked store, single output DMA.  Wrapper slices the result.
    lane_o = lax.broadcasted_iota(jnp.int32, (Bp, Dp), 1)
    out_ref[...] = jnp.where(lane_o == emb_col, out_col, emb_full)


def prepare_params(params):
    """One-time parameter preparation (run OUTSIDE the per-call jit):
    pad the hidden dim so each gate sits on its own 128-lane tile, cast the
    matmul weights to bf16, and pack/fold the tiny head operands."""
    W_ih, W_hh, b, W_e, b_e, W_o, b_o = params
    I = W_ih.shape[0]
    H = W_hh.shape[0]
    E = W_e.shape[1]
    assert W_o.shape[1] == 1, "fc_out reduction path assumes output_size == 1"

    Hp = pl.cdiv(H, 128) * 128     # lane-align each gate (H=50 -> Hp=128)
    Dp = 128                       # lane-padded head width
    assert H < Hp, "bias folding uses a guaranteed-padded hidden lane"
    assert E + 1 < Dp, "need a free lane for `out` and one for the const-1 column"

    def pad_gates(w, rows_out):
        rows = w.shape[0]
        out = jnp.zeros((rows_out, 4 * Hp), jnp.float32)
        for g in range(4):
            out = out.at[:rows, g * Hp:g * Hp + H].set(w[:, g * H:(g + 1) * H])
        return out

    # Padded lanes/rows are exactly zero, so padded hidden lanes of h/c stay
    # exactly zero through the recurrence (sigmoid(0)=0.5, tanh(0)=0).
    W_ih_p = pad_gates(W_ih, I).astype(jnp.bfloat16)        # (I, 4*Hp)  bf16
    W_hh_p = pad_gates(W_hh, Hp).astype(jnp.bfloat16)       # (Hp, 4*Hp) bf16
    b_p = pad_gates(b, 1)                                   # (1, 4*Hp)  f32

    # fc_embed packed: rows :H = W_e; row Hp-1 = b_e (driven by the forced-1
    # lane of h); 1-generator at [Hp-1, Dp-1] so emb_full[:, Dp-1] == 1.
    W_e_head = jnp.zeros((Hp, Dp), jnp.float32)
    W_e_head = W_e_head.at[:H, :E].set(W_e)
    W_e_head = W_e_head.at[Hp - 1, :E].set(b_e[0])
    W_e_head = W_e_head.at[Hp - 1, Dp - 1].set(1.0)

    # fc_out packed: W_o in lanes :E, b_o in lane Dp-1.
    wo_full = jnp.zeros((1, Dp), jnp.float32)
    wo_full = wo_full.at[0, :E].set(W_o[:, 0])
    wo_full = wo_full.at[0, Dp - 1].set(b_o[0, 0])

    return (W_ih_p, W_hh_p, b_p, W_e_head, wo_full)


def lstm_model_forward(x, prepared, *, embed_size):
    """x: (B, T, I) float32 (batch_first, like the PyTorch module).

    Returns (embedding (B, E), out (B, 1))."""
    W_ih_p, W_hh_p, b_p, W_e_head, wo_full = prepared
    B, T, I = x.shape
    Dp = W_e_head.shape[1]
    E = embed_size
    assert B <= BP, "at this size a single invocation is optimal; for larger B add a parallel batch grid axis"

    # Per-call layout plumbing on 2*8*12 floats: t-major rows, batch padded to
    # BP sublanes so every per-step slice inside the kernel is tile-aligned.
    x_t = jnp.transpose(x, (1, 0, 2)).astype(jnp.bfloat16)   # (T, B, I)
    x_t = jnp.pad(x_t, ((0, 0), (0, BP - B), (0, 0)))        # (T, BP, I)
    x2d = x_t.reshape(T * BP, I)                             # (T*BP, I)

    vmem = pl.BlockSpec(memory_space=pltpu.MemorySpace.VMEM)
    # No grid: single invocation, whole arrays resident in VMEM (< 400 KiB,
    # far under the scoped-VMEM limit on v5e/v6e/v7x).
    slab = pl.pallas_call(
        functools.partial(lstm_kernel, emb_col=E),
        out_shape=jax.ShapeDtypeStruct((BP, Dp), jnp.float32),
        in_specs=[vmem] * 6,
        out_specs=vmem,
    )(x2d, W_ih_p, W_hh_p, b_p, W_e_head, wo_full)

    emb = slab[:B, :E]
    out = slab[:B, E:E + 1]
    return emb, out


def init_params(key, input_size, hidden_size, embed_size, output_size):
    """Deterministic init mimicking PyTorch's uniform(-1/sqrt(fan), 1/sqrt(fan))."""
    ks = jax.random.split(key, 10)
    k_lstm = 1.0 / jnp.sqrt(hidden_size)
    # stored pre-transposed: (I, 4H), (H, 4H); gate order [i, f, g, o]
    W_ih = jax.random.uniform(ks[0], (input_size, 4 * hidden_size),
                              minval=-k_lstm, maxval=k_lstm, dtype=jnp.float32)
    W_hh = jax.random.uniform(ks[1], (hidden_size, 4 * hidden_size),
                              minval=-k_lstm, maxval=k_lstm, dtype=jnp.float32)
    b_ih = jax.random.uniform(ks[2], (1, 4 * hidden_size),
                              minval=-k_lstm, maxval=k_lstm, dtype=jnp.float32)
    b_hh = jax.random.uniform(ks[3], (1, 4 * hidden_size),
                              minval=-k_lstm, maxval=k_lstm, dtype=jnp.float32)
    b = b_ih + b_hh

    k_e = 1.0 / jnp.sqrt(hidden_size)
    W_e = jax.random.uniform(ks[4], (hidden_size, embed_size),
                             minval=-k_e, maxval=k_e, dtype=jnp.float32)
    b_e = jax.random.uniform(ks[5], (1, embed_size),
                             minval=-k_e, maxval=k_e, dtype=jnp.float32)

    k_o = 1.0 / jnp.sqrt(embed_size)
    W_o = jax.random.uniform(ks[6], (embed_size, output_size),
                             minval=-k_o, maxval=k_o, dtype=jnp.float32)
    b_o = jax.random.uniform(ks[7], (1, output_size),
                             minval=-k_o, maxval=k_o, dtype=jnp.float32)
    return (W_ih, W_hh, b, W_e, b_e, W_o, b_o)


def reference_forward(x, params):
    """Pure-JAX f32 reference of the PyTorch forward (lax.scan LSTM), same op
    order as the kernel: gates = (x@W_ih + b) + h@W_hh."""
    W_ih, W_hh, b, W_e, b_e, W_o, b_o = params
    B, T, I = x.shape
    H = W_hh.shape[0]

    def step(carry, x_t):
        h, c = carry
        gates = (x_t @ W_ih + b) + h @ W_hh
        i = jax.nn.sigmoid(gates[:, 0 * H:1 * H])
        f = jax.nn.sigmoid(gates[:, 1 * H:2 * H])
        g = jnp.tanh(gates[:, 2 * H:3 * H])
        o = jax.nn.sigmoid(gates[:, 3 * H:4 * H])
        c = f * c + i * g
        h = o * jnp.tanh(c)
        return (h, c), None

    h0 = jnp.zeros((B, H), jnp.float32)
    c0 = jnp.zeros((B, H), jnp.float32)
    (h, _), _ = lax.scan(step, (h0, c0), jnp.transpose(x, (1, 0, 2)))
    emb = h @ W_e + b_e
    out = emb @ W_o + b_o
    return emb, out


if __name__ == "__main__":
    # Small shapes consistent with the module: input_size = #features of the
    # SQL table (synthetic: 12), hidden_size=50, embed_size=20, output_size=1.
    B, T = 2, 8
    input_size, hidden_size, embed_size, output_size = 12, 50, 20, 1

    key = jax.random.PRNGKey(0)
    k_x, k_p = jax.random.split(key)
    x = jax.random.normal(k_x, (B, T, input_size), dtype=jnp.float32)
    params = init_params(k_p, input_size, hidden_size, embed_size, output_size)

    # One-time parameter preparation (padding / bf16 cast / head packing),
    # hoisted out of the per-call jit.
    prepared = jax.block_until_ready(prepare_params(params))

    forward = jax.jit(functools.partial(lstm_model_forward,
                                        embed_size=embed_size))
    emb, out = forward(x, prepared)
    jax.block_until_ready((emb, out))

    emb_expect, out_expect = reference_forward(x, params)
    assert emb.shape == (B, embed_size) and out.shape == (B, output_size)
    # bf16 matmul operands (f32 accumulate / f32 state & elementwise) -> the
    # tolerance is loosened vs. the pure-f32 reference.
    assert jnp.allclose(emb, emb_expect, atol=2e-2, rtol=2e-2), \
        float(jnp.max(jnp.abs(emb - emb_expect)))
    assert jnp.allclose(out, out_expect, atol=2e-2, rtol=2e-2), \
        float(jnp.max(jnp.abs(out - out_expect)))

    print("KERNEL_OK")
</pallas_src>

<mosaic_0001>
module attributes {stable_mosaic.version = 11 : i64} {
  func.func @lstm_kernel(%arg0: memref<64x12xbf16, #tpu.memory_space<vmem>>, %arg1: memref<12x512xbf16, #tpu.memory_space<vmem>>, %arg2: memref<128x512xbf16, #tpu.memory_space<vmem>>, %arg3: memref<1x512xf32, #tpu.memory_space<vmem>>, %arg4: memref<128x128xf32, #tpu.memory_space<vmem>>, %arg5: memref<1x128xf32, #tpu.memory_space<vmem>>, %arg6: memref<8x128xf32, #tpu.memory_space<vmem>>) attributes {dimension_semantics = [], scalar_prefetch = 0 : i64, scratch_operands = 0 : i64, tpu.core_type = #tpu.core_type<tc>} {
    %c0 = arith.constant 0 : index
    %c0_0 = arith.constant 0 : index
    %0 = vector.load %arg0[%c0, %c0_0] : memref<64x12xbf16, #tpu.memory_space<vmem>>, vector<64x12xbf16>
    %c0_1 = arith.constant 0 : index
    %c0_2 = arith.constant 0 : index
    %1 = vector.load %arg1[%c0_1, %c0_2] : memref<12x512xbf16, #tpu.memory_space<vmem>>, vector<12x512xbf16>
    %cst = arith.constant dense<0.000000e+00> : vector<64x512xf32>
    %2 = tpu.matmul %0, %1, %cst {dimension_numbers = #tpu.dot_dimension_numbers<[1], [0], [0], [1], [0, 0, 1, 1], [], []>} : vector<64x12xbf16>, vector<12x512xbf16>, vector<64x512xf32> -> vector<64x512xf32>
    %c0_3 = arith.constant 0 : index
    %c0_4 = arith.constant 0 : index
    %3 = vector.load %arg3[%c0_3, %c0_4] : memref<1x512xf32, #tpu.memory_space<vmem>>, vector<1x512xf32>
    %4 = vector.broadcast %3 : vector<1x512xf32> to vector<64x512xf32>
    %5 = arith.addf %2, %4 : vector<64x512xf32>
    %cst_5 = arith.constant 0.000000e+00 : f32
    %6 = vector.broadcast %cst_5 : f32 to vector<8x128xf32>
    %cst_6 = arith.constant 0.000000e+00 : f32
    %7 = vector.broadcast %cst_6 : f32 to vector<8x128xf32>
    %8 = vector.extract_strided_slice %5 {offsets = [0, 0], sizes = [8, 512], strides = [1, 1]} : vector<64x512xf32> to vector<8x512xf32>
    %9 = arith.truncf %6 : vector<8x128xf32> to vector<8x128xbf16>
    %c0_7 = arith.constant 0 : index
    %c0_8 = arith.constant 0 : index
    %10 = vector.load %arg2[%c0_7, %c0_8] : memref<128x512xbf16, #tpu.memory_space<vmem>>, vector<128x512xbf16>
    %cst_9 = arith.constant dense<0.000000e+00> : vector<8x512xf32>
    %11 = tpu.matmul %9, %10, %cst_9 {dimension_numbers = #tpu.dot_dimension_numbers<[1], [0], [0], [1], [0, 0, 1, 1], [], []>} : vector<8x128xbf16>, vector<128x512xbf16>, vector<8x512xf32> -> vector<8x512xf32>
    %12 = arith.addf %8, %11 : vector<8x512xf32>
    %13 = vector.extract_strided_slice %12 {offsets = [0, 0], sizes = [8, 128], strides = [1, 1]} : vector<8x512xf32> to vector<8x128xf32>
    %cst_10 = arith.constant 5.000000e-01 : f32
    %14 = vector.broadcast %cst_10 : f32 to vector<8x128xf32>
    %15 = arith.mulf %14, %13 : vector<8x128xf32>
    %16 = math.tanh %15 : vector<8x128xf32>
    %cst_11 = arith.constant 5.000000e-01 : f32
    %17 = vector.broadcast %cst_11 : f32 to vector<8x128xf32>
    %18 = arith.mulf %17, %16 : vector<8x128xf32>
    %cst_12 = arith.constant 5.000000e-01 : f32
    %19 = vector.broadcast %cst_12 : f32 to vector<8x128xf32>
    %20 = arith.addf %18, %19 : vector<8x128xf32>
    %21 = vector.extract_strided_slice %12 {offsets = [0, 128], sizes = [8, 128], strides = [1, 1]} : vector<8x512xf32> to vector<8x128xf32>
    %cst_13 = arith.constant 5.000000e-01 : f32
    %22 = vector.broadcast %cst_13 : f32 to vector<8x128xf32>
    %23 = arith.mulf %22, %21 : vector<8x128xf32>
    %24 = math.tanh %23 : vector<8x128xf32>
    %cst_14 = arith.constant 5.000000e-01 : f32
    %25 = vector.broadcast %cst_14 : f32 to vector<8x128xf32>
    %26 = arith.mulf %25, %24 : vector<8x128xf32>
    %cst_15 = arith.constant 5.000000e-01 : f32
    %27 = vector.broadcast %cst_15 : f32 to vector<8x128xf32>
    %28 = arith.addf %26, %27 : vector<8x128xf32>
    %29 = vector.extract_strided_slice %12 {offsets = [0, 256], sizes = [8, 128], strides = [1, 1]} : vector<8x512xf32> to vector<8x128xf32>
    %30 = math.tanh %29 : vector<8x128xf32>
    %31 = vector.extract_strided_slice %12 {offsets = [0, 384], sizes = [8, 128], strides = [1, 1]} : vector<8x512xf32> to vector<8x128xf32>
    %cst_16 = arith.constant 5.000000e-01 : f32
    %32 = vector.broadcast %cst_16 : f32 to vector<8x128xf32>
    %33 = arith.mulf %32, %31 : vector<8x128xf32>
    %34 = math.tanh %33 : vector<8x128xf32>
    %cst_17 = arith.constant 5.000000e-01 : f32
    %35 = vector.broadcast %cst_17 : f32 to vector<8x128xf32>
    %36 = arith.mulf %35, %34 : vector<8x128xf32>
    %cst_18 = arith.constant 5.000000e-01 : f32
    %37 = vector.broadcast %cst_18 : f32 to vector<8x128xf32>
    %38 = arith.addf %36, %37 : vector<8x128xf32>
    %39 = arith.mulf %28, %7 : vector<8x128xf32>
    %40 = arith.mulf %20, %30 : vector<8x128xf32>
    %41 = arith.addf %39, %40 : vector<8x128xf32>
    %42 = math.tanh %41 : vector<8x128xf32>
    %43 = arith.mulf %38, %42 : vector<8x128xf32>
    %44 = vector.extract_strided_slice %5 {offsets = [8, 0], sizes = [8, 512], strides = [1, 1]} : vector<64x512xf32> to vector<8x512xf32>
    %45 = arith.truncf %43 : vector<8x128xf32> to vector<8x128xbf16>
    %c0_19 = arith.constant 0 : index
    %c0_20 = arith.constant 0 : index
    %46 = vector.load %arg2[%c0_19, %c0_20] : memref<128x512xbf16, #tpu.memory_space<vmem>>, vector<128x512xbf16>
    %cst_21 = arith.constant dense<0.000000e+00> : vector<8x512xf32>
    %47 = tpu.matmul %45, %46, %cst_21 {dimension_numbers = #tpu.dot_dimension_numbers<[1], [0], [0], [1], [0, 0, 1, 1], [], []>} : vector<8x128xbf16>, vector<128x512xbf16>, vector<8x512xf32> -> vector<8x512xf32>
    %48 = arith.addf %44, %47 : vector<8x512xf32>
    %49 = vector.extract_strided_slice %48 {offsets = [0, 0], sizes = [8, 128], strides = [1, 1]} : vector<8x512xf32> to vector<8x128xf32>
    %cst_22 = arith.constant 5.000000e-01 : f32
    %50 = vector.broadcast %cst_22 : f32 to vector<8x128xf32>
    %51 = arith.mulf %50, %49 : vector<8x128xf32>
    %52 = math.tanh %51 : vector<8x128xf32>
    %cst_23 = arith.constant 5.000000e-01 : f32
    %53 = vector.broadcast %cst_23 : f32 to vector<8x128xf32>
    %54 = arith.mulf %53, %52 : vector<8x128xf32>
    %cst_24 = arith.constant 5.000000e-01 : f32
    %55 = vector.broadcast %cst_24 : f32 to vector<8x128xf32>
    %56 = arith.addf %54, %55 : vector<8x128xf32>
    %57 = vector.extract_strided_slice %48 {offsets = [0, 128], sizes = [8, 128], strides = [1, 1]} : vector<8x512xf32> to vector<8x128xf32>
    %cst_25 = arith.constant 5.000000e-01 : f32
    %58 = vector.broadcast %cst_25 : f32 to vector<8x128xf32>
    %59 = arith.mulf %58, %57 : vector<8x128xf32>
    %60 = math.tanh %59 : vector<8x128xf32>
    %cst_26 = arith.constant 5.000000e-01 : f32
    %61 = vector.broadcast %cst_26 : f32 to vector<8x128xf32>
    %62 = arith.mulf %61, %60 : vector<8x128xf32>
    %cst_27 = arith.constant 5.000000e-01 : f32
    %63 = vector.broadcast %cst_27 : f32 to vector<8x128xf32>
    %64 = arith.addf %62, %63 : vector<8x128xf32>
    %65 = vector.extract_strided_slice %48 {offsets = [0, 256], sizes = [8, 128], strides = [1, 1]} : vector<8x512xf32> to vector<8x128xf32>
    %66 = math.tanh %65 : vector<8x128xf32>
    %67 = vector.extract_strided_slice %48 {offsets = [0, 384], sizes = [8, 128], strides = [1, 1]} : vector<8x512xf32> to vector<8x128xf32>
    %cst_28 = arith.constant 5.000000e-01 : f32
    %68 = vector.broadcast %cst_28 : f32 to vector<8x128xf32>
    %69 = arith.mulf %68, %67 : vector<8x128xf32>
    %70 = math.tanh %69 : vector<8x128xf32>
    %cst_29 = arith.constant 5.000000e-01 : f32
    %71 = vector.broadcast %cst_29 : f32 to vector<8x128xf32>
    %72 = arith.mulf %71, %70 : vector<8x128xf32>
    %cst_30 = arith.constant 5.000000e-01 : f32
    %73 = vector.broadcast %cst_30 : f32 to vector<8x128xf32>
    %74 = arith.addf %72, %73 : vector<8x128xf32>
    %75 = arith.mulf %64, %41 : vector<8x128xf32>
    %76 = arith.mulf %56, %66 : vector<8x128xf32>
    %77 = arith.addf %75, %76 : vector<8x128xf32>
    %78 = math.tanh %77 : vector<8x128xf32>
    %79 = arith.mulf %74, %78 : vector<8x128xf32>
    %80 = vector.extract_strided_slice %5 {offsets = [16, 0], sizes = [8, 512], strides = [1, 1]} : vector<64x512xf32> to vector<8x512xf32>
    %81 = arith.truncf %79 : vector<8x128xf32> to vector<8x128xbf16>
    %c0_31 = arith.constant 0 : index
    %c0_32 = arith.constant 0 : index
    %82 = vector.load %arg2[%c0_31, %c0_32] : memref<128x512xbf16, #tpu.memory_space<vmem>>, vector<128x512xbf16>
    %cst_33 = arith.constant dense<0.000000e+00> : vector<8x512xf32>
    %83 = tpu.matmul %81, %82, %cst_33 {dimension_numbers = #tpu.dot_dimension_numbers<[1], [0], [0], [1], [0, 0, 1, 1], [], []>} : vector<8x128xbf16>, vector<128x512xbf16>, vector<8x512xf32> -> vector<8x512xf32>
    %84 = arith.addf %80, %83 : vector<8x512xf32>
    %85 = vector.extract_strided_slice %84 {offsets = [0, 0], sizes = [8, 128], strides = [1, 1]} : vector<8x512xf32> to vector<8x128xf32>
    %cst_34 = arith.constant 5.000000e-01 : f32
    %86 = vector.broadcast %cst_34 : f32 to vector<8x128xf32>
    %87 = arith.mulf %86, %85 : vector<8x128xf32>
    %88 = math.tanh %87 : vector<8x128xf32>
    %cst_35 = arith.constant 5.000000e-01 : f32
    %89 = vector.broadcast %cst_35 : f32 to vector<8x128xf32>
    %90 = arith.mulf %89, %88 : vector<8x128xf32>
    %cst_36 = arith.constant 5.000000e-01 : f32
    %91 = vector.broadcast %cst_36 : f32 to vector<8x128xf32>
    %92 = arith.addf %90, %91 : vector<8x128xf32>
    %93 = vector.extract_strided_slice %84 {offsets = [0, 128], sizes = [8, 128], strides = [1, 1]} : vector<8x512xf32> to vector<8x128xf32>
    %cst_37 = arith.constant 5.000000e-01 : f32
    %94 = vector.broadcast %cst_37 : f32 to vector<8x128xf32>
    %95 = arith.mulf %94, %93 : vector<8x128xf32>
    %96 = math.tanh %95 : vector<8x128xf32>
    %cst_38 = arith.constant 5.000000e-01 : f32
    %97 = vector.broadcast %cst_38 : f32 to vector<8x128xf32>
    %98 = arith.mulf %97, %96 : vector<8x128xf32>
    %cst_39 = arith.constant 5.000000e-01 : f32
    %99 = vector.broadcast %cst_39 : f32 to vector<8x128xf32>
    %100 = arith.addf %98, %99 : vector<8x128xf32>
    %101 = vector.extract_strided_slice %84 {offsets = [0, 256], sizes = [8, 128], strides = [1, 1]} : vector<8x512xf32> to vector<8x128xf32>
    %102 = math.tanh %101 : vector<8x128xf32>
    %103 = vector.extract_strided_slice %84 {offsets = [0, 384], sizes = [8, 128], strides = [1, 1]} : vector<8x512xf32> to vector<8x128xf32>
    %cst_40 = arith.constant 5.000000e-01 : f32
    %104 = vector.broadcast %cst_40 : f32 to vector<8x128xf32>
    %105 = arith.mulf %104, %103 : vector<8x128xf32>
    %106 = math.tanh %105 : vector<8x128xf32>
    %cst_41 = arith.constant 5.000000e-01 : f32
    %107 = vector.broadcast %cst_41 : f32 to vector<8x128xf32>
    %108 = arith.mulf %107, %106 : vector<8x128xf32>
    %cst_42 = arith.constant 5.000000e-01 : f32
    %109 = vector.broadcast %cst_42 : f32 to vector<8x128xf32>
    %110 = arith.addf %108, %109 : vector<8x128xf32>
    %111 = arith.mulf %100, %77 : vector<8x128xf32>
    %112 = arith.mulf %92, %102 : vector<8x128xf32>
    %113 = arith.addf %111, %112 : vector<8x128xf32>
    %114 = math.tanh %113 : vector<8x128xf32>
    %115 = arith.mulf %110, %114 : vector<8x128xf32>
    %116 = vector.extract_strided_slice %5 {offsets = [24, 0], sizes = [8, 512], strides = [1, 1]} : vector<64x512xf32> to vector<8x512xf32>
    %117 = arith.truncf %115 : vector<8x128xf32> to vector<8x128xbf16>
    %c0_43 = arith.constant 0 : index
    %c0_44 = arith.constant 0 : index
    %118 = vector.load %arg2[%c0_43, %c0_44] : memref<128x512xbf16, #tpu.memory_space<vmem>>, vector<128x512xbf16>
    %cst_45 = arith.constant dense<0.000000e+00> : vector<8x512xf32>
    %119 = tpu.matmul %117, %118, %cst_45 {dimension_numbers = #tpu.dot_dimension_numbers<[1], [0], [0], [1], [0, 0, 1, 1], [], []>} : vector<8x128xbf16>, vector<128x512xbf16>, vector<8x512xf32> -> vector<8x512xf32>
    %120 = arith.addf %116, %119 : vector<8x512xf32>
    %121 = vector.extract_strided_slice %120 {offsets = [0, 0], sizes = [8, 128], strides = [1, 1]} : vector<8x512xf32> to vector<8x128xf32>
    %cst_46 = arith.constant 5.000000e-01 : f32
    %122 = vector.broadcast %cst_46 : f32 to vector<8x128xf32>
    %123 = arith.mulf %122, %121 : vector<8x128xf32>
    %124 = math.tanh %123 : vector<8x128xf32>
    %cst_47 = arith.constant 5.000000e-01 : f32
    %125 = vector.broadcast %cst_47 : f32 to vector<8x128xf32>
    %126 = arith.mulf %125, %124 : vector<8x128xf32>
    %cst_48 = arith.constant 5.000000e-01 : f32
    %127 = vector.broadcast %cst_48 : f32 to vector<8x128xf32>
    %128 = arith.addf %126, %127 : vector<8x128xf32>
    %129 = vector.extract_strided_slice %120 {offsets = [0, 128], sizes = [8, 128], strides = [1, 1]} : vector<8x512xf32> to vector<8x128xf32>
    %cst_49 = arith.constant 5.000000e-01 : f32
    %130 = vector.broadcast %cst_49 : f32 to vector<8x128xf32>
    %131 = arith.mulf %130, %129 : vector<8x128xf32>
    %132 = math.tanh %131 : vector<8x128xf32>
    %cst_50 = arith.constant 5.000000e-01 : f32
    %133 = vector.broadcast %cst_50 : f32 to vector<8x128xf32>
    %134 = arith.mulf %133, %132 : vector<8x128xf32>
    %cst_51 = arith.constant 5.000000e-01 : f32
    %135 = vector.broadcast %cst_51 : f32 to vector<8x128xf32>
    %136 = arith.addf %134, %135 : vector<8x128xf32>
    %137 = vector.extract_strided_slice %120 {offsets = [0, 256], sizes = [8, 128], strides = [1, 1]} : vector<8x512xf32> to vector<8x128xf32>
    %138 = math.tanh %137 : vector<8x128xf32>
    %139 = vector.extract_strided_slice %120 {offsets = [0, 384], sizes = [8, 128], strides = [1, 1]} : vector<8x512xf32> to vector<8x128xf32>
    %cst_52 = arith.constant 5.000000e-01 : f32
    %140 = vector.broadcast %cst_52 : f32 to vector<8x128xf32>
    %141 = arith.mulf %140, %139 : vector<8x128xf32>
    %142 = math.tanh %141 : vector<8x128xf32>
    %cst_53 = arith.constant 5.000000e-01 : f32
    %143 = vector.broadcast %cst_53 : f32 to vector<8x128xf32>
    %144 = arith.mulf %143, %142 : vector<8x128xf32>
    %cst_54 = arith.constant 5.000000e-01 : f32
    %145 = vector.broadcast %cst_54 : f32 to vector<8x128xf32>
    %146 = arith.addf %144, %145 : vector<8x128xf32>
    %147 = arith.mulf %136, %113 : vector<8x128xf32>
    %148 = arith.mulf %128, %138 : vector<8x128xf32>
    %149 = arith.addf %147, %148 : vector<8x128xf32>
    %150 = math.tanh %149 : vector<8x128xf32>
    %151 = arith.mulf %146, %150 : vector<8x128xf32>
    %152 = vector.extract_strided_slice %5 {offsets = [32, 0], sizes = [8, 512], strides = [1, 1]} : vector<64x512xf32> to vector<8x512xf32>
    %153 = arith.truncf %151 : vector<8x128xf32> to vector<8x128xbf16>
    %c0_55 = arith.constant 0 : index
    %c0_56 = arith.constant 0 : index
    %154 = vector.load %arg2[%c0_55, %c0_56] : memref<128x512xbf16, #tpu.memory_space<vmem>>, vector<128x512xbf16>
    %cst_57 = arith.constant dense<0.000000e+00> : vector<8x512xf32>
    %155 = tpu.matmul %153, %154, %cst_57 {dimension_numbers = #tpu.dot_dimension_numbers<[1], [0], [0], [1], [0, 0, 1, 1], [], []>} : vector<8x128xbf16>, vector<128x512xbf16>, vector<8x512xf32> -> vector<8x512xf32>
    %156 = arith.addf %152, %155 : vector<8x512xf32>
    %157 = vector.extract_strided_slice %156 {offsets = [0, 0], sizes = [8, 128], strides = [1, 1]} : vector<8x512xf32> to vector<8x128xf32>
    %cst_58 = arith.constant 5.000000e-01 : f32
    %158 = vector.broadcast %cst_58 : f32 to vector<8x128xf32>
    %159 = arith.mulf %158, %157 : vector<8x128xf32>
    %160 = math.tanh %159 : vector<8x128xf32>
    %cst_59 = arith.constant 5.000000e-01 : f32
    %161 = vector.broadcast %cst_59 : f32 to vector<8x128xf32>
    %162 = arith.mulf %161, %160 : vector<8x128xf32>
    %cst_60 = arith.constant 5.000000e-01 : f32
    %163 = vector.broadcast %cst_60 : f32 to vector<8x128xf32>
    %164 = arith.addf %162, %163 : vector<8x128xf32>
    %165 = vector.extract_strided_slice %156 {offsets = [0, 128], sizes = [8, 128], strides = [1, 1]} : vector<8x512xf32> to vector<8x128xf32>
    %cst_61 = arith.constant 5.000000e-01 : f32
    %166 = vector.broadcast %cst_61 : f32 to vector<8x128xf32>
    %167 = arith.mulf %166, %165 : vector<8x128xf32>
    %168 = math.tanh %167 : vector<8x128xf32>
    %cst_62 = arith.constant 5.000000e-01 : f32
    %169 = vector.broadcast %cst_62 : f32 to vector<8x128xf32>
    %170 = arith.mulf %169, %168 : vector<8x128xf32>
    %cst_63 = arith.constant 5.000000e-01 : f32
    %171 = vector.broadcast %cst_63 : f32 to vector<8x128xf32>
    %172 = arith.addf %170, %171 : vector<8x128xf32>
    %173 = vector.extract_strided_slice %156 {offsets = [0, 256], sizes = [8, 128], strides = [1, 1]} : vector<8x512xf32> to vector<8x128xf32>
    %174 = math.tanh %173 : vector<8x128xf32>
    %175 = vector.extract_strided_slice %156 {offsets = [0, 384], sizes = [8, 128], strides = [1, 1]} : vector<8x512xf32> to vector<8x128xf32>
    %cst_64 = arith.constant 5.000000e-01 : f32
    %176 = vector.broadcast %cst_64 : f32 to vector<8x128xf32>
    %177 = arith.mulf %176, %175 : vector<8x128xf32>
    %178 = math.tanh %177 : vector<8x128xf32>
    %cst_65 = arith.constant 5.000000e-01 : f32
    %179 = vector.broadcast %cst_65 : f32 to vector<8x128xf32>
    %180 = arith.mulf %179, %178 : vector<8x128xf32>
    %cst_66 = arith.constant 5.000000e-01 : f32
    %181 = vector.broadcast %cst_66 : f32 to vector<8x128xf32>
    %182 = arith.addf %180, %181 : vector<8x128xf32>
    %183 = arith.mulf %172, %149 : vector<8x128xf32>
    %184 = arith.mulf %164, %174 : vector<8x128xf32>
    %185 = arith.addf %183, %184 : vector<8x128xf32>
    %186 = math.tanh %185 : vector<8x128xf32>
    %187 = arith.mulf %182, %186 : vector<8x128xf32>
    %188 = vector.extract_strided_slice %5 {offsets = [40, 0], sizes = [8, 512], strides = [1, 1]} : vector<64x512xf32> to vector<8x512xf32>
    %189 = arith.truncf %187 : vector<8x128xf32> to vector<8x128xbf16>
    %c0_67 = arith.constant 0 : index
    %c0_68 = arith.constant 0 : index
    %190 = vector.load %arg2[%c0_67, %c0_68] : memref<128x512xbf16, #tpu.memory_space<vmem>>, vector<128x512xbf16>
    %cst_69 = arith.constant dense<0.000000e+00> : vector<8x512xf32>
    %191 = tpu.matmul %189, %190, %cst_69 {dimension_numbers = #tpu.dot_dimension_numbers<[1], [0], [0], [1], [0, 0, 1, 1], [], []>} : vector<8x128xbf16>, vector<128x512xbf16>, vector<8x512xf32> -> vector<8x512xf32>
    %192 = arith.addf %188, %191 : vector<8x512xf32>
    %193 = vector.extract_strided_slice %192 {offsets = [0, 0], sizes = [8, 128], strides = [1, 1]} : vector<8x512xf32> to vector<8x128xf32>
    %cst_70 = arith.constant 5.000000e-01 : f32
    %194 = vector.broadcast %cst_70 : f32 to vector<8x128xf32>
    %195 = arith.mulf %194, %193 : vector<8x128xf32>
    %196 = math.tanh %195 : vector<8x128xf32>
    %cst_71 = arith.constant 5.000000e-01 : f32
    %197 = vector.broadcast %cst_71 : f32 to vector<8x128xf32>
    %198 = arith.mulf %197, %196 : vector<8x128xf32>
    %cst_72 = arith.constant 5.000000e-01 : f32
    %199 = vector.broadcast %cst_72 : f32 to vector<8x128xf32>
    %200 = arith.addf %198, %199 : vector<8x128xf32>
    %201 = vector.extract_strided_slice %192 {offsets = [0, 128], sizes = [8, 128], strides = [1, 1]} : vector<8x512xf32> to vector<8x128xf32>
    %cst_73 = arith.constant 5.000000e-01 : f32
    %202 = vector.broadcast %cst_73 : f32 to vector<8x128xf32>
    %203 = arith.mulf %202, %201 : vector<8x128xf32>
    %204 = math.tanh %203 : vector<8x128xf32>
    %cst_74 = arith.constant 5.000000e-01 : f32
    %205 = vector.broadcast %cst_74 : f32 to vector<8x128xf32>
    %206 = arith.mulf %205, %204 : vector<8x128xf32>
    %cst_75 = arith.constant 5.000000e-01 : f32
    %207 = vector.broadcast %cst_75 : f32 to vector<8x128xf32>
    %208 = arith.addf %206, %207 : vector<8x128xf32>
    %209 = vector.extract_strided_slice %192 {offsets = [0, 256], sizes = [8, 128], strides = [1, 1]} : vector<8x512xf32> to vector<8x128xf32>
    %210 = math.tanh %209 : vector<8x128xf32>
    %211 = vector.extract_strided_slice %192 {offsets = [0, 384], sizes = [8, 128], strides = [1, 1]} : vector<8x512xf32> to vector<8x128xf32>
    %cst_76 = arith.constant 5.000000e-01 : f32
    %212 = vector.broadcast %cst_76 : f32 to vector<8x128xf32>
    %213 = arith.mulf %212, %211 : vector<8x128xf32>
    %214 = math.tanh %213 : vector<8x128xf32>
    %cst_77 = arith.constant 5.000000e-01 : f32
    %215 = vector.broadcast %cst_77 : f32 to vector<8x128xf32>
    %216 = arith.mulf %215, %214 : vector<8x128xf32>
    %cst_78 = arith.constant 5.000000e-01 : f32
    %217 = vector.broadcast %cst_78 : f32 to vector<8x128xf32>
    %218 = arith.addf %216, %217 : vector<8x128xf32>
    %219 = arith.mulf %208, %185 : vector<8x128xf32>
    %220 = arith.mulf %200, %210 : vector<8x128xf32>
    %221 = arith.addf %219, %220 : vector<8x128xf32>
    %222 = math.tanh %221 : vector<8x128xf32>
    %223 = arith.mulf %218, %222 : vector<8x128xf32>
    %224 = vector.extract_strided_slice %5 {offsets = [48, 0], sizes = [8, 512], strides = [1, 1]} : vector<64x512xf32> to vector<8x512xf32>
    %225 = arith.truncf %223 : vector<8x128xf32> to vector<8x128xbf16>
    %c0_79 = arith.constant 0 : index
    %c0_80 = arith.constant 0 : index
    %226 = vector.load %arg2[%c0_79, %c0_80] : memref<128x512xbf16, #tpu.memory_space<vmem>>, vector<128x512xbf16>
    %cst_81 = arith.constant dense<0.000000e+00> : vector<8x512xf32>
    %227 = tpu.matmul %225, %226, %cst_81 {dimension_numbers = #tpu.dot_dimension_numbers<[1], [0], [0], [1], [0, 0, 1, 1], [], []>} : vector<8x128xbf16>, vector<128x512xbf16>, vector<8x512xf32> -> vector<8x512xf32>
    %228 = arith.addf %224, %227 : vector<8x512xf32>
    %229 = vector.extract_strided_slice %228 {offsets = [0, 0], sizes = [8, 128], strides = [1, 1]} : vector<8x512xf32> to vector<8x128xf32>
    %cst_82 = arith.constant 5.000000e-01 : f32
    %230 = vector.broadcast %cst_82 : f32 to vector<8x128xf32>
    %231 = arith.mulf %230, %229 : vector<8x128xf32>
    %232 = math.tanh %231 : vector<8x128xf32>
    %cst_83 = arith.constant 5.000000e-01 : f32
    %233 = vector.broadcast %cst_83 : f32 to vector<8x128xf32>
    %234 = arith.mulf %233, %232 : vector<8x128xf32>
    %cst_84 = arith.constant 5.000000e-01 : f32
    %235 = vector.broadcast %cst_84 : f32 to vector<8x128xf32>
    %236 = arith.addf %234, %235 : vector<8x128xf32>
    %237 = vector.extract_strided_slice %228 {offsets = [0, 128], sizes = [8, 128], strides = [1, 1]} : vector<8x512xf32> to vector<8x128xf32>
    %cst_85 = arith.constant 5.000000e-01 : f32
    %238 = vector.broadcast %cst_85 : f32 to vector<8x128xf32>
    %239 = arith.mulf %238, %237 : vector<8x128xf32>
    %240 = math.tanh %239 : vector<8x128xf32>
    %cst_86 = arith.constant 5.000000e-01 : f32
    %241 = vector.broadcast %cst_86 : f32 to vector<8x128xf32>
    %242 = arith.mulf %241, %240 : vector<8x128xf32>
    %cst_87 = arith.constant 5.000000e-01 : f32
    %243 = vector.broadcast %cst_87 : f32 to vector<8x128xf32>
    %244 = arith.addf %242, %243 : vector<8x128xf32>
    %245 = vector.extract_strided_slice %228 {offsets = [0, 256], sizes = [8, 128], strides = [1, 1]} : vector<8x512xf32> to vector<8x128xf32>
    %246 = math.tanh %245 : vector<8x128xf32>
    %247 = vector.extract_strided_slice %228 {offsets = [0, 384], sizes = [8, 128], strides = [1, 1]} : vector<8x512xf32> to vector<8x128xf32>
    %cst_88 = arith.constant 5.000000e-01 : f32
    %248 = vector.broadcast %cst_88 : f32 to vector<8x128xf32>
    %249 = arith.mulf %248, %247 : vector<8x128xf32>
    %250 = math.tanh %249 : vector<8x128xf32>
    %cst_89 = arith.constant 5.000000e-01 : f32
    %251 = vector.broadcast %cst_89 : f32 to vector<8x128xf32>
    %252 = arith.mulf %251, %250 : vector<8x128xf32>
    %cst_90 = arith.constant 5.000000e-01 : f32
    %253 = vector.broadcast %cst_90 : f32 to vector<8x128xf32>
    %254 = arith.addf %252, %253 : vector<8x128xf32>
    %255 = arith.mulf %244, %221 : vector<8x128xf32>
    %256 = arith.mulf %236, %246 : vector<8x128xf32>
    %257 = arith.addf %255, %256 : vector<8x128xf32>
    %258 = math.tanh %257 : vector<8x128xf32>
    %259 = arith.mulf %254, %258 : vector<8x128xf32>
    %260 = vector.extract_strided_slice %5 {offsets = [56, 0], sizes = [8, 512], strides = [1, 1]} : vector<64x512xf32> to vector<8x512xf32>
    %261 = arith.truncf %259 : vector<8x128xf32> to vector<8x128xbf16>
    %c0_91 = arith.constant 0 : index
    %c0_92 = arith.constant 0 : index
    %262 = vector.load %arg2[%c0_91, %c0_92] : memref<128x512xbf16, #tpu.memory_space<vmem>>, vector<128x512xbf16>
    %cst_93 = arith.constant dense<0.000000e+00> : vector<8x512xf32>
    %263 = tpu.matmul %261, %262, %cst_93 {dimension_numbers = #tpu.dot_dimension_numbers<[1], [0], [0], [1], [0, 0, 1, 1], [], []>} : vector<8x128xbf16>, vector<128x512xbf16>, vector<8x512xf32> -> vector<8x512xf32>
    %264 = arith.addf %260, %263 : vector<8x512xf32>
    %265 = vector.extract_strided_slice %264 {offsets = [0, 0], sizes = [8, 128], strides = [1, 1]} : vector<8x512xf32> to vector<8x128xf32>
    %cst_94 = arith.constant 5.000000e-01 : f32
    %266 = vector.broadcast %cst_94 : f32 to vector<8x128xf32>
    %267 = arith.mulf %266, %265 : vector<8x128xf32>
    %268 = math.tanh %267 : vector<8x128xf32>
    %cst_95 = arith.constant 5.000000e-01 : f32
    %269 = vector.broadcast %cst_95 : f32 to vector<8x128xf32>
    %270 = arith.mulf %269, %268 : vector<8x128xf32>
    %cst_96 = arith.constant 5.000000e-01 : f32
    %271 = vector.broadcast %cst_96 : f32 to vector<8x128xf32>
    %272 = arith.addf %270, %271 : vector<8x128xf32>
    %273 = vector.extract_strided_slice %264 {offsets = [0, 128], sizes = [8, 128], strides = [1, 1]} : vector<8x512xf32> to vector<8x128xf32>
    %cst_97 = arith.constant 5.000000e-01 : f32
    %274 = vector.broadcast %cst_97 : f32 to vector<8x128xf32>
    %275 = arith.mulf %274, %273 : vector<8x128xf32>
    %276 = math.tanh %275 : vector<8x128xf32>
    %cst_98 = arith.constant 5.000000e-01 : f32
    %277 = vector.broadcast %cst_98 : f32 to vector<8x128xf32>
    %278 = arith.mulf %277, %276 : vector<8x128xf32>
    %cst_99 = arith.constant 5.000000e-01 : f32
    %279 = vector.broadcast %cst_99 : f32 to vector<8x128xf32>
    %280 = arith.addf %278, %279 : vector<8x128xf32>
    %281 = vector.extract_strided_slice %264 {offsets = [0, 256], sizes = [8, 128], strides = [1, 1]} : vector<8x512xf32> to vector<8x128xf32>
    %282 = math.tanh %281 : vector<8x128xf32>
    %283 = vector.extract_strided_slice %264 {offsets = [0, 384], sizes = [8, 128], strides = [1, 1]} : vector<8x512xf32> to vector<8x128xf32>
    %cst_100 = arith.constant 5.000000e-01 : f32
    %284 = vector.broadcast %cst_100 : f32 to vector<8x128xf32>
    %285 = arith.mulf %284, %283 : vector<8x128xf32>
    %286 = math.tanh %285 : vector<8x128xf32>
    %cst_101 = arith.constant 5.000000e-01 : f32
    %287 = vector.broadcast %cst_101 : f32 to vector<8x128xf32>
    %288 = arith.mulf %287, %286 : vector<8x128xf32>
    %cst_102 = arith.constant 5.000000e-01 : f32
    %289 = vector.broadcast %cst_102 : f32 to vector<8x128xf32>
    %290 = arith.addf %288, %289 : vector<8x128xf32>
    %291 = arith.mulf %280, %257 : vector<8x128xf32>
    %292 = arith.mulf %272, %282 : vector<8x128xf32>
    %293 = arith.addf %291, %292 : vector<8x128xf32>
    %294 = math.tanh %293 : vector<8x128xf32>
    %295 = arith.mulf %290, %294 : vector<8x128xf32>
    %296 = tpu.iota {dimensions = array<i32: 1>} : vector<8x128xi32>
    %c127_i32 = arith.constant 127 : i32
    %297 = vector.broadcast %c127_i32 : i32 to vector<8x128xi32>
    %298 = arith.cmpi eq, %296, %297 : vector<8x128xi32>
    %cst_103 = arith.constant 1.000000e+00 : f32
    %299 = vector.broadcast %cst_103 : f32 to vector<8x128xf32>
    %300 = arith.select %298, %299, %295 : vector<8x128xi1>, vector<8x128xf32>
    %c0_104 = arith.constant 0 : index
    %c0_105 = arith.constant 0 : index
    %301 = vector.load %arg4[%c0_104, %c0_105] : memref<128x128xf32, #tpu.memory_space<vmem>>, vector<128x128xf32>
    %cst_106 = arith.constant dense<0.000000e+00> : vector<8x128xf32>
    %302 = tpu.matmul %300, %301, %cst_106 {dimension_numbers = #tpu.dot_dimension_numbers<[1], [0], [0], [1], [0, 0, 1, 1], [], []>} : vector<8x128xf32>, vector<128x128xf32>, vector<8x128xf32> -> vector<8x128xf32>
    %c0_107 = arith.constant 0 : index
    %c0_108 = arith.constant 0 : index
    %303 = vector.load %arg5[%c0_107, %c0_108] : memref<1x128xf32, #tpu.memory_space<vmem>>, vector<1x128xf32>
    %304 = vector.broadcast %303 : vector<1x128xf32> to vector<8x128xf32>
    %305 = arith.mulf %302, %304 : vector<8x128xf32>
    %cst_109 = arith.constant dense<0.000000e+00> : vector<8xf32>
    %306 = vector.multi_reduction <add>, %305, %cst_109 [1] : vector<8x128xf32> to vector<8xf32>
    %307 = vector.shape_cast %306 : vector<8xf32> to vector<8x1xf32>
    %308 = tpu.iota {dimensions = array<i32: 1>} : vector<8x128xi32>
    %c20_i32 = arith.constant 20 : i32
    %309 = vector.broadcast %c20_i32 : i32 to vector<8x128xi32>
    %310 = arith.cmpi eq, %308, %309 : vector<8x128xi32>
    %311 = vector.shape_cast %307 : vector<8x1xf32> to vector<8x1xf32>
    %312 = vector.broadcast %311 : vector<8x1xf32> to vector<8x128xf32>
    %313 = arith.select %310, %312, %302 : vector<8x128xi1>, vector<8x128xf32>
    %c0_110 = arith.constant 0 : index
    %c0_111 = arith.constant 0 : index
    %314 = vector.load %arg6[%c0_110, %c0_111] : memref<8x128xf32, #tpu.memory_space<vmem>>, vector<8x128xf32>
    tpu.vector_store %arg6[%c0_110, %c0_111], %313 {strides = array<i32>} : memref<8x128xf32, #tpu.memory_space<vmem>>, vector<8x128xf32>,
    return
  }
}

</mosaic_0001>

<llo_original>
// kernel: lstm_model_forward.1
$region0: #{lstm_model_forward.1}
  #allocation0 [shape = 'u32[]', space=smem, size = 0x4, offset = 0x4, fixed_abs, tag = 'smem constant byte address 0x4 - core index']
  #allocation1 [shape = 'u32[144,128]{1,0:T(1,128)}', space=vmem, size = 0x12000, scoped, tag = 'internal scratch']
  %s0 = inlined_call_operand.vmem [shape: bf16[64,12], index: 0, kind: input, shape index: {}]
  %s1 = inlined_call_operand.vmem [shape: bf16[12,512], index: 1, kind: input, shape index: {}]
  %s2 = inlined_call_operand.hbm [shape: bf16[128,512], index: 2, kind: input, shape index: {}]
  %s3 = inlined_call_operand.vmem [shape: f32[1,512], index: 3, kind: input, shape index: {}]
  %s4 = inlined_call_operand.hbm [shape: f32[128,128], index: 4, kind: input, shape index: {}]
  %s5 = inlined_call_operand.vmem [shape: f32[1,128], index: 5, kind: input, shape index: {}]
  %s6 = inlined_call_operand.vmem [shape: f32[8,128], index: 6, kind: output, shape index: {}]
  %s7 = sld [smem:[#allocation0]]
  $region42: #{lstm_model_forward.1} parent=0
    _
  %s9 = ssub.s32 1, %s7
  %s10 = scalar_select 0, %s9, %s7
  $region1: #{lstm_model_forward.1} parent=0
    #allocation2 [shape = 'u8[131072]{0}', space=vmem, size = 0x20000, scoped, tag = 'input window, operand 2, single buffered']
    #allocation3 [shape = 's32[1]{0}', space=sflag, size = 0x4, scoped, tag = 'scoped memory for lstm_model_forward.1']
    #allocation4 [shape = 'u8[65536]{0}', space=vmem, size = 0x10000, scoped, tag = 'input window, operand 4, single buffered']
    #allocation5 [shape = 's32[1]{0}', space=sflag, size = 0x4, scoped, tag = 'scoped memory for lstm_model_forward.1']
    %11 = vsyncpa [#allocation3], 0
    %12 = vsyncpa [#allocation5], 0
    // Predicated region
    $region2: #{lstm_model_forward.1} parent=1 // pred_check
      _
    $region3: #{lstm_model_forward.1} parent=1 // pred_check_branch
      %14 = sbr.rel (0) target = $region5
    $region4: #{lstm_model_forward.1} parent=1 // pred_region
      _
    $region5: #{lstm_model_forward.1} parent=1 // pred_fallthru
      _
    // Predicated region
    $region6: #{lstm_model_forward.1} parent=1 // pred_check
      _
    $region7: #{lstm_model_forward.1} parent=1 // pred_check_branch
      %16 = sbr.rel (0) target = $region9
    $region8: #{lstm_model_forward.1} parent=1 // pred_region
      _
    $region9: #{lstm_model_forward.1} parent=1 // pred_fallthru
      _
    // Predicated region
    $region10: #{lstm_model_forward.1} parent=1 // pred_check
      _
    $region11: #{lstm_model_forward.1} parent=1 // pred_check_branch
      %18 = sbr.rel (0) target = $region13
    $region12: #{lstm_model_forward.1} parent=1 // pred_region
      %s20 = ssub.s32 4096, 4096
      %21 = vsyncadd [#allocation3], %s20
      %s22 = sshll.u32 [#allocation2], 4
      %s23 = int_to_ptr.vmem [resolvable:$true] %s22
      %28 = dma.hbm_to_vmem [thread:$0]  %s2, 4096, %s23, [#allocation3], 256, 256, 16
    $region13: #{lstm_model_forward.1} parent=1 // pred_fallthru
      _
    // Predicated region
    $region14: #{lstm_model_forward.1} parent=1 // pred_check
      _
    $region15: #{lstm_model_forward.1} parent=1 // pred_check_branch
      %30 = sbr.rel (0) target = $region17
    $region16: #{lstm_model_forward.1} parent=1 // pred_region
      _
    $region17: #{lstm_model_forward.1} parent=1 // pred_fallthru
      _
    // Predicated region
    $region18: #{lstm_model_forward.1} parent=1 // pred_check
      _
    $region19: #{lstm_model_forward.1} parent=1 // pred_check_branch
      %32 = sbr.rel (0) target = $region21
    $region20: #{lstm_model_forward.1} parent=1 // pred_region
      %s34 = ssub.s32 2048, 2048
      %35 = vsyncadd [#allocation5], %s34
      %s36 = sshll.u32 [#allocation4], 4
      %s37 = int_to_ptr.vmem [resolvable:$true] %s36
      %42 = dma.hbm_to_vmem [thread:$0]  %s4, 2048, %s37, [#allocation5], 128, 128, 8
    $region21: #{lstm_model_forward.1} parent=1 // pred_fallthru
      _
    // Predicated region
    $region22: #{lstm_model_forward.1} parent=1 // pred_check
      _
    $region23: #{lstm_model_forward.1} parent=1 // pred_check_branch
      %44 = sbr.rel (0) target = $region25
    $region24: #{lstm_model_forward.1} parent=1 // pred_region
      _
    $region25: #{lstm_model_forward.1} parent=1 // pred_fallthru
      _
    // Predicated region
    $region26: #{lstm_model_forward.1} parent=1 // pred_check
      _
    $region27: #{lstm_model_forward.1} parent=1 // pred_check_branch
      %46 = sbr.rel (0) target = $region29
    $region28: #{lstm_model_forward.1} parent=1 // pred_region
      %47 = dma.done [#allocation3], 4096
    $region29: #{lstm_model_forward.1} parent=1 // pred_fallthru
      _
    // Predicated region
    $region30: #{lstm_model_forward.1} parent=1 // pred_check
      _
    $region31: #{lstm_model_forward.1} parent=1 // pred_check_branch
      %49 = sbr.rel (0) target = $region33
    $region32: #{lstm_model_forward.1} parent=1 // pred_region
      %50 = dma.done [#allocation5], 2048
    $region33: #{lstm_model_forward.1} parent=1 // pred_fallthru
      _
    %v52 = vld [vmem:[%s0] sm:$0xf]
    %v53 = vld [vmem:[%s0 + $0x4] sm:$0xf]
    %v54 = vld [vmem:[%s0 + $0x8] sm:$0xf]
    %v55 = vld [vmem:[%s0 + $0xc] sm:$0xf]
    %v56 = vld [vmem:[%s0 + $0x10] sm:$0xf]
    %v57 = vld [vmem:[%s0 + $0x14] sm:$0xf]
    %v58 = vld [vmem:[%s0 + $0x18] sm:$0xf]
    %v59 = vld [vmem:[%s0 + $0x1c] sm:$0xf]
    %v60 = vld [vmem:[%s1] sm:$0xff]
    %v61 = vld [vmem:[%s1 + $0x8] sm:$0xff]
    %v62 = vld [vmem:[%s1 + $0x10] sm:$0x33]
    %v63 = vld [vmem:[%s1 + $0x18] sm:$0x33]
    %v64 = vld [vmem:[%s3] sm:$0xf]
    %v66 = vlaneseq
    %v67 = vshrl.u32 %v66, 7
    %v68 = vsub.s32 0, %v67
    %v69 = vrot.slane %v64, %v68
    %v70 = vlaneseq
    %v71 = vshrl.u32 %v70, 7
    %v72 = vsub.s32 1, %v71
    %v73 = vrot.slane %v64, %v72
    %v74 = vlaneseq
    %v75 = vshrl.u32 %v74, 7
    %v76 = vsub.s32 2, %v75
    %v77 = vrot.slane %v64, %v76
    %v78 = vlaneseq
    %v79 = vshrl.u32 %v78, 7
    %v80 = vsub.s32 3, %v79
    %v81 = vrot.slane %v64, %v80
    %v94 = vunpack.c.l.b16 %v52
    %v95 = vunpack.c.l.b16 %v53
    %v96 = vunpack.c.l.b16 %v54
    %v97 = vunpack.c.l.b16 %v55
    %v98 = vunpack.c.l.b16 %v56
    %v99 = vunpack.c.l.b16 %v57
    %v100 = vunpack.c.l.b16 %v58
    %v101 = vunpack.c.l.b16 %v59
    %v102 = vpack.c.b16 %v95, %v94
    %v103 = vpack.c.b16 %v97, %v96
    %v104 = vpack.c.b16 %v99, %v98
    %v105 = vpack.c.b16 %v101, %v100
    %v110 = vunpack.c.l.b16 %v60
    %v111 = vunpack.c.h.b16 %v60
    %v112 = vunpack.c.l.b16 %v61
    %v113 = vunpack.c.h.b16 %v61
    %v114 = vunpack.c.l.b16 %v62
    %v115 = vunpack.c.h.b16 %v62
    %v116 = vunpack.c.l.b16 %v63
    %v117 = vunpack.c.h.b16 %v63
    %v118 = vpack.c.b16 %v114, %v110
    %v119 = vpack.c.b16 %v115, %v111
    %v120 = vpack.c.b16 %v116, %v112
    %v121 = vpack.c.b16 %v117, %v113
    %vm122 = vcmask 97280
    %v124 = vsel %vm122, %v102, 0
    %v127 = vsel %vm122, %v103, 0
    %v130 = vsel %vm122, %v104, 0
    %v133 = vsel %vm122, %v105, 0
    %vm135 = vcmask 1045504
    %v137 = vsel %vm135, %v118, 0
    %v140 = vsel %vm135, %v119, 0
    %v143 = vsel %vm135, %v120, 0
    %v146 = vsel %vm135, %v121, 0
    %148 = vmatprep.subr.bf16.mxu0 %v140
    %149 = vmatpush1.bf16.msra.mxu0 %v137
    %150 = vmatprep.subr.bf16.mxu0 0
    %151 = vmatpush1.bf16.msra.mxu0 0
    %152 = vmatprep.subr.bf16.mxu0 0
    %153 = vmatpush1.bf16.msra.mxu0 0
    %154 = vmatprep.subr.bf16.mxu0 0
    %155 = vmatpush1.bf16.msra.mxu0 0
    %156 = vmatprep.subr.bf16.mxu0 0
    %157 = vmatpush1.bf16.msra.mxu0 0
    %158 = vmatprep.subr.bf16.mxu0 0
    %159 = vmatpush1.bf16.msra.mxu0 0
    %160 = vmatprep.subr.bf16.mxu0 0
    %161 = vmatpush1.bf16.msra.mxu0 0
    %162 = vmatprep.subr.bf16.mxu0 0
    %163 = vmatpush1.bf16.msra.mxu0 0
    %164 = vmatprep.subr.bf16.mxu0 0
    %165 = vmatpush1.bf16.msra.mxu0 0
    %166 = vmatprep.subr.bf16.mxu0 0
    %167 = vmatpush1.bf16.msra.mxu0 0
    %168 = vmatprep.subr.bf16.mxu0 0
    %169 = vmatpush1.bf16.msra.mxu0 0
    %170 = vmatprep.subr.bf16.mxu0 0
    %171 = vmatpush1.bf16.msra.mxu0 0
    %172 = vmatprep.subr.bf16.mxu0 0
    %173 = vmatpush1.bf16.msra.mxu0 0
    %174 = vmatprep.subr.bf16.mxu0 0
    %175 = vmatpush1.bf16.msra.mxu0 0
    %176 = vmatprep.subr.bf16.mxu0 0
    %177 = vmatpush1.bf16.msra.mxu0 0
    %178 = vmatprep.subr.bf16.mxu0 0
    %179 = vmatpush1.bf16.msra.mxu0 0
    %180 = vmatprep.mubr.bf16.mxu0 0
    %181 = vmatmul.mubr.bf16.gmra.mrb[0].mxu0 %v124
    %v182 = vpop.f32.mrb[0].mxu0
    %v183 = vadd.f32 %v69, %v182
    %v184 = vpop.f32.mrb[0].mxu0
    %v185 = vadd.f32 %v73, %v184
    %v186 = vpop.f32.mrb[0].mxu0
    %v187 = vadd.f32 %v69, %v186
    %v188 = vpop.f32.mrb[0].mxu0
    %v189 = vadd.f32 %v73, %v188
    %190 = vmatprep.mubr.bf16.mxu0 0
    %191 = vmatmul.mubr.bf16.gmra.mrb[0].mxu0 %v127
    %v192 = vpop.f32.mrb[0].mxu0
    %v193 = vadd.f32 %v69, %v192
    %v194 = vpop.f32.mrb[0].mxu0
    %v195 = vadd.f32 %v73, %v194
    %v196 = vpop.f32.mrb[0].mxu0
    %v197 = vadd.f32 %v69, %v196
    %v198 = vpop.f32.mrb[0].mxu0
    %v199 = vadd.f32 %v73, %v198
    %200 = vmatprep.mubr.bf16.mxu0 0
    %201 = vmatmul.mubr.bf16.gmra.mrb[0].mxu0 %v130
    %v202 = vpop.f32.mrb[0].mxu0
    %v203 = vadd.f32 %v69, %v202
    %v204 = vpop.f32.mrb[0].mxu0
    %v205 = vadd.f32 %v73, %v204
    %v206 = vpop.f32.mrb[0].mxu0
    %v207 = vadd.f32 %v69, %v206
    %v208 = vpop.f32.mrb[0].mxu0
    %v209 = vadd.f32 %v73, %v208
    %210 = vmatprep.mubr.bf16.mxu0 0
    %211 = vmatmul.mubr.bf16.gmra.mrb[0].mxu0 %v133
    %v212 = vpop.f32.mrb[0].mxu0
    %v213 = vadd.f32 %v69, %v212
    %v214 = vpop.f32.mrb[0].mxu0
    %v215 = vadd.f32 %v73, %v214
    %v216 = vpop.f32.mrb[0].mxu0
    %v217 = vadd.f32 %v69, %v216
    %v218 = vpop.f32.mrb[0].mxu0
    %v219 = vadd.f32 %v73, %v218
    %220 = vdwg.mxu0
    %221 = vmatprep.subr.bf16.mxu0 %v146
    %222 = vmatpush1.bf16.msra.mxu0 %v143
    %223 = vmatprep.subr.bf16.mxu0 0
    %224 = vmatpush1.bf16.msra.mxu0 0
    %225 = vmatprep.subr.bf16.mxu0 0
    %226 = vmatpush1.bf16.msra.mxu0 0
    %227 = vmatprep.subr.bf16.mxu0 0
    %228 = vmatpush1.bf16.msra.mxu0 0
    %229 = vmatprep.subr.bf16.mxu0 0
    %230 = vmatpush1.bf16.msra.mxu0 0
    %231 = vmatprep.subr.bf16.mxu0 0
    %232 = vmatpush1.bf16.msra.mxu0 0
    %233 = vmatprep.subr.bf16.mxu0 0
    %234 = vmatpush1.bf16.msra.mxu0 0
    %235 = vmatprep.subr.bf16.mxu0 0
    %236 = vmatpush1.bf16.msra.mxu0 0
    %237 = vmatprep.subr.bf16.mxu0 0
    %238 = vmatpush1.bf16.msra.mxu0 0
    %239 = vmatprep.subr.bf16.mxu0 0
    %240 = vmatpush1.bf16.msra.mxu0 0
    %241 = vmatprep.subr.bf16.mxu0 0
    %242 = vmatpush1.bf16.msra.mxu0 0
    %243 = vmatprep.subr.bf16.mxu0 0
    %244 = vmatpush1.bf16.msra.mxu0 0
    %245 = vmatprep.subr.bf16.mxu0 0
    %246 = vmatpush1.bf16.msra.mxu0 0
    %247 = vmatprep.subr.bf16.mxu0 0
    %248 = vmatpush1.bf16.msra.mxu0 0
    %249 = vmatprep.subr.bf16.mxu0 0
    %250 = vmatpush1.bf16.msra.mxu0 0
    %251 = vmatprep.subr.bf16.mxu0 0
    %252 = vmatpush1.bf16.msra.mxu0 0
    %253 = vmatprep.mubr.bf16.mxu0 0
    %254 = vmatmul.mubr.bf16.gmra.mrb[0].mxu0 %v124
    %v255 = vpop.f32.mrb[0].mxu0
    %v256 = vadd.f32 %v77, %v255
    %v257 = vpop.f32.mrb[0].mxu0
    %v258 = vadd.f32 %v81, %v257
    %v259 = vpop.f32.mrb[0].mxu0
    %v260 = vadd.f32 %v77, %v259
    %v261 = vpop.f32.mrb[0].mxu0
    %v262 = vadd.f32 %v81, %v261
    %263 = vmatprep.mubr.bf16.mxu0 0
    %264 = vmatmul.mubr.bf16.gmra.mrb[0].mxu0 %v127
    %v265 = vpop.f32.mrb[0].mxu0
    %v266 = vadd.f32 %v77, %v265
    %v267 = vpop.f32.mrb[0].mxu0
    %v268 = vadd.f32 %v81, %v267
    %v269 = vpop.f32.mrb[0].mxu0
    %v270 = vadd.f32 %v77, %v269
    %v271 = vpop.f32.mrb[0].mxu0
    %v272 = vadd.f32 %v81, %v271
    %273 = vmatprep.mubr.bf16.mxu0 0
    %274 = vmatmul.mubr.bf16.gmra.mrb[0].mxu0 %v130
    %v275 = vpop.f32.mrb[0].mxu0
    %v276 = vadd.f32 %v77, %v275
    %v277 = vpop.f32.mrb[0].mxu0
    %v278 = vadd.f32 %v81, %v277
    %v279 = vpop.f32.mrb[0].mxu0
    %v280 = vadd.f32 %v77, %v279
    %v281 = vpop.f32.mrb[0].mxu0
    %v282 = vadd.f32 %v81, %v281
    %283 = vmatprep.mubr.bf16.mxu0 0
    %284 = vmatmul.mubr.bf16.gmra.mrb[0].mxu0 %v133
    %v285 = vpop.f32.mrb[0].mxu0
    %v286 = vadd.f32 %v77, %v285
    %v287 = vpop.f32.mrb[0].mxu0
    %v288 = vadd.f32 %v81, %v287
    %v289 = vpop.f32.mrb[0].mxu0
    %v290 = vadd.f32 %v77, %v289
    %v291 = vpop.f32.mrb[0].mxu0
    %v292 = vadd.f32 %v81, %v291
    %293 = vdwg.mxu0
    %v294 = vld [vmem:[#allocation2] sm:$0xff]
    %v295 = vld [vmem:[#allocation2 + $0x8] sm:$0xff]
    %v296 = vld [vmem:[#allocation2 + $0x10] sm:$0xff]
    %v297 = vld [vmem:[#allocation2 + $0x18] sm:$0xff]
    %v298 = vld [vmem:[#allocation2 + $0x20] sm:$0xff]
    %v299 = vld [vmem:[#allocation2 + $0x28] sm:$0xff]
    %v300 = vld [vmem:[#allocation2 + $0x30] sm:$0xff]
    %v301 = vld [vmem:[#allocation2 + $0x38] sm:$0xff]
    %v302 = vld [vmem:[#allocation2 + $0x40] sm:$0xff]
    %v303 = vld [vmem:[#allocation2 + $0x48] sm:$0xff]
    %v304 = vld [vmem:[#allocation2 + $0x50] sm:$0xff]
    %v305 = vld [vmem:[#allocation2 + $0x58] sm:$0xff]
    %v306 = vld [vmem:[#allocation2 + $0x60] sm:$0xff]
    %v307 = vld [vmem:[#allocation2 + $0x68] sm:$0xff]
    %v308 = vld [vmem:[#allocation2 + $0x70] sm:$0xff]
    %v309 = vld [vmem:[#allocation2 + $0x78] sm:$0xff]
    %v310 = vld [vmem:[#allocation2 + $0x80] sm:$0xff]
    %v311 = vld [vmem:[#allocation2 + $0x88] sm:$0xff]
    %v312 = vld [vmem:[#allocation2 + $0x90] sm:$0xff]
    %v313 = vld [vmem:[#allocation2 + $0x98] sm:$0xff]
    %v314 = vld [vmem:[#allocation2 + $0xa0] sm:$0xff]
    %v315 = vld [vmem:[#allocation2 + $0xa8] sm:$0xff]
    %v316 = vld [vmem:[#allocation2 + $0xb0] sm:$0xff]
    %v317 = vld [vmem:[#allocation2 + $0xb8] sm:$0xff]
    %v318 = vld [vmem:[#allocation2 + $0xc0] sm:$0xff]
    %v319 = vld [vmem:[#allocation2 + $0xc8] sm:$0xff]
    %v320 = vld [vmem:[#allocation2 + $0xd0] sm:$0xff]
    %v321 = vld [vmem:[#allocation2 + $0xd8] sm:$0xff]
    %v322 = vld [vmem:[#allocation2 + $0xe0] sm:$0xff]
    %v323 = vld [vmem:[#allocation2 + $0xe8] sm:$0xff]
    %v324 = vld [vmem:[#allocation2 + $0xf0] sm:$0xff]
    %v325 = vld [vmem:[#allocation2 + $0xf8] sm:$0xff]
    %v358 = vunpack.c.l.b16 %v294
    %v359 = vunpack.c.h.b16 %v294
    %v360 = vunpack.c.l.b16 %v295
    %v361 = vunpack.c.h.b16 %v295
    %v362 = vunpack.c.l.b16 %v296
    %v363 = vunpack.c.h.b16 %v296
    %v364 = vunpack.c.l.b16 %v297
    %v365 = vunpack.c.h.b16 %v297
    %v366 = vunpack.c.l.b16 %v298
    %v367 = vunpack.c.h.b16 %v298
    %v368 = vunpack.c.l.b16 %v299
    %v369 = vunpack.c.h.b16 %v299
    %v370 = vunpack.c.l.b16 %v300
    %v371 = vunpack.c.h.b16 %v300
    %v372 = vunpack.c.l.b16 %v301
    %v373 = vunpack.c.h.b16 %v301
    %v374 = vunpack.c.l.b16 %v302
    %v375 = vunpack.c.h.b16 %v302
    %v376 = vunpack.c.l.b16 %v303
    %v377 = vunpack.c.h.b16 %v303
    %v378 = vunpack.c.l.b16 %v304
    %v379 = vunpack.c.h.b16 %v304
    %v380 = vunpack.c.l.b16 %v305
    %v381 = vunpack.c.h.b16 %v305
    %v382 = vunpack.c.l.b16 %v306
    %v383 = vunpack.c.h.b16 %v306
    %v384 = vunpack.c.l.b16 %v307
    %v385 = vunpack.c.h.b16 %v307
    %v386 = vunpack.c.l.b16 %v308
    %v387 = vunpack.c.h.b16 %v308
    %v388 = vunpack.c.l.b16 %v309
    %v389 = vunpack.c.h.b16 %v309
    %v390 = vunpack.c.l.b16 %v310
    %v391 = vunpack.c.h.b16 %v310
    %v392 = vunpack.c.l.b16 %v311
    %v393 = vunpack.c.h.b16 %v311
    %v394 = vunpack.c.l.b16 %v312
    %v395 = vunpack.c.h.b16 %v312
    %v396 = vunpack.c.l.b16 %v313
    %v397 = vunpack.c.h.b16 %v313
    %v398 = vunpack.c.l.b16 %v314
    %v399 = vunpack.c.h.b16 %v314
    %v400 = vunpack.c.l.b16 %v315
    %v401 = vunpack.c.h.b16 %v315
    %v402 = vunpack.c.l.b16 %v316
    %v403 = vunpack.c.h.b16 %v316
    %v404 = vunpack.c.l.b16 %v317
    %v405 = vunpack.c.h.b16 %v317
    %v406 = vunpack.c.l.b16 %v318
    %v407 = vunpack.c.h.b16 %v318
    %v408 = vunpack.c.l.b16 %v319
    %v409 = vunpack.c.h.b16 %v319
    %v410 = vunpack.c.l.b16 %v320
    %v411 = vunpack.c.h.b16 %v320
    %v412 = vunpack.c.l.b16 %v321
    %v413 = vunpack.c.h.b16 %v321
    %v414 = vunpack.c.l.b16 %v322
    %v415 = vunpack.c.h.b16 %v322
    %v416 = vunpack.c.l.b16 %v323
    %v417 = vunpack.c.h.b16 %v323
    %v418 = vunpack.c.l.b16 %v324
    %v419 = vunpack.c.h.b16 %v324
    %v420 = vunpack.c.l.b16 %v325
    %v421 = vunpack.c.h.b16 %v325
    %v422 = vpack.c.b16 %v362, %v358
    %v423 = vpack.c.b16 %v363, %v359
    %v424 = vpack.c.b16 %v364, %v360
    %v425 = vpack.c.b16 %v365, %v361
    %v426 = vpack.c.b16 %v370, %v366
    %v427 = vpack.c.b16 %v371, %v367
    %v428 = vpack.c.b16 %v372, %v368
    %v429 = vpack.c.b16 %v373, %v369
    %v430 = vpack.c.b16 %v378, %v374
    %v431 = vpack.c.b16 %v379, %v375
    %v432 = vpack.c.b16 %v380, %v376
    %v433 = vpack.c.b16 %v381, %v377
    %v434 = vpack.c.b16 %v386, %v382
    %v435 = vpack.c.b16 %v387, %v383
    %v436 = vpack.c.b16 %v388, %v384
    %v437 = vpack.c.b16 %v389, %v385
    %v438 = vpack.c.b16 %v394, %v390
    %v439 = vpack.c.b16 %v395, %v391
    %v440 = vpack.c.b16 %v396, %v392
    %v441 = vpack.c.b16 %v397, %v393
    %v442 = vpack.c.b16 %v402, %v398
    %v443 = vpack.c.b16 %v403, %v399
    %v444 = vpack.c.b16 %v404, %v400
    %v445 = vpack.c.b16 %v405, %v401
    %v446 = vpack.c.b16 %v410, %v406
    %v447 = vpack.c.b16 %v411, %v407
    %v448 = vpack.c.b16 %v412, %v408
    %v449 = vpack.c.b16 %v413, %v409
    %v450 = vpack.c.b16 %v418, %v414
    %v451 = vpack.c.b16 %v419, %v415
    %v452 = vpack.c.b16 %v420, %v416
    %v453 = vpack.c.b16 %v421, %v417
    %486 = vmatprep.subr.bf16.mxu0 %v423
    %487 = vmatpush1.bf16.msra.mxu0 %v422
    %488 = vmatprep.subr.bf16.mxu0 %v427
    %489 = vmatpush1.bf16.msra.mxu0 %v426
    %490 = vmatprep.subr.bf16.mxu0 %v431
    %491 = vmatpush1.bf16.msra.mxu0 %v430
    %492 = vmatprep.subr.bf16.mxu0 %v435
    %493 = vmatpush1.bf16.msra.mxu0 %v434
    %494 = vmatprep.subr.bf16.mxu0 %v439
    %495 = vmatpush1.bf16.msra.mxu0 %v438
    %496 = vmatprep.subr.bf16.mxu0 %v443
    %497 = vmatpush1.bf16.msra.mxu0 %v442
    %498 = vmatprep.subr.bf16.mxu0 %v447
    %499 = vmatpush1.bf16.msra.mxu0 %v446
    %500 = vmatprep.subr.bf16.mxu0 %v451
    %501 = vmatpush1.bf16.msra.mxu0 %v450
    %502 = vmatprep.subr.bf16.mxu0 0
    %503 = vmatpush1.bf16.msra.mxu0 0
    %504 = vmatprep.subr.bf16.mxu0 0
    %505 = vmatpush1.bf16.msra.mxu0 0
    %506 = vmatprep.subr.bf16.mxu0 0
    %507 = vmatpush1.bf16.msra.mxu0 0
    %508 = vmatprep.subr.bf16.mxu0 0
    %509 = vmatpush1.bf16.msra.mxu0 0
    %510 = vmatprep.subr.bf16.mxu0 0
    %511 = vmatpush1.bf16.msra.mxu0 0
    %512 = vmatprep.subr.bf16.mxu0 0
    %513 = vmatpush1.bf16.msra.mxu0 0
    %514 = vmatprep.subr.bf16.mxu0 0
    %515 = vmatpush1.bf16.msra.mxu0 0
    %516 = vmatprep.subr.bf16.mxu0 0
    %517 = vmatpush1.bf16.msra.mxu0 0
    %518 = vmatprep.mubr.bf16.mxu0 0
    %519 = vmatmul.mubr.bf16.gmra.mrb[0].mxu0 0
    %v520 = vpop.f32.mrb[0].mxu0
    %v521 = vadd.f32 0.0, %v520
    %v522 = vpop.f32.mrb[0].mxu0
    %v523 = vadd.f32 0.0, %v522
    %v524 = vpop.f32.mrb[0].mxu0
    %v525 = vpop.f32.mrb[0].mxu0
    %526 = vdwg.mxu0
    %527 = vmatprep.subr.bf16.mxu0 %v425
    %528 = vmatpush1.bf16.msra.mxu0 %v424
    %529 = vmatprep.subr.bf16.mxu0 %v429
    %530 = vmatpush1.bf16.msra.mxu0 %v428
    %531 = vmatprep.subr.bf16.mxu0 %v433
    %532 = vmatpush1.bf16.msra.mxu0 %v432
    %533 = vmatprep.subr.bf16.mxu0 %v437
    %534 = vmatpush1.bf16.msra.mxu0 %v436
    %535 = vmatprep.subr.bf16.mxu0 %v441
    %536 = vmatpush1.bf16.msra.mxu0 %v440
    %537 = vmatprep.subr.bf16.mxu0 %v445
    %538 = vmatpush1.bf16.msra.mxu0 %v444
    %539 = vmatprep.subr.bf16.mxu0 %v449
    %540 = vmatpush1.bf16.msra.mxu0 %v448
    %541 = vmatprep.subr.bf16.mxu0 %v453
    %542 = vmatpush1.bf16.msra.mxu0 %v452
    %543 = vmatprep.subr.bf16.mxu0 0
    %544 = vmatpush1.bf16.msra.mxu0 0
    %545 = vmatprep.subr.bf16.mxu0 0
    %546 = vmatpush1.bf16.msra.mxu0 0
    %547 = vmatprep.subr.bf16.mxu0 0
    %548 = vmatpush1.bf16.msra.mxu0 0
    %549 = vmatprep.subr.bf16.mxu0 0
    %550 = vmatpush1.bf16.msra.mxu0 0
    %551 = vmatprep.subr.bf16.mxu0 0
    %552 = vmatpush1.bf16.msra.mxu0 0
    %553 = vmatprep.subr.bf16.mxu0 0
    %554 = vmatpush1.bf16.msra.mxu0 0
    %555 = vmatprep.subr.bf16.mxu0 0
    %556 = vmatpush1.bf16.msra.mxu0 0
    %557 = vmatprep.subr.bf16.mxu0 0
    %558 = vmatpush1.bf16.msra.mxu0 0
    %559 = vmatprep.mubr.bf16.mxu0 0
    %560 = vmatmul.mubr.bf16.gmra.mrb[0].mxu0 0
    %v561 = vpop.f32.mrb[0].mxu0
    %v562 = vadd.f32 0.0, %v561
    %v563 = vpop.f32.mrb[0].mxu0
    %v564 = vadd.f32 0.0, %v563
    %v565 = vpop.f32.mrb[0].mxu0
    %v566 = vpop.f32.mrb[0].mxu0
    %567 = vdwg.mxu0
    %v568 = vadd.f32 %v183, %v521
    %v569 = vadd.f32 %v185, %v523
    %v570 = vadd.f32 %v256, %v562
    %v571 = vadd.f32 %v258, %v564
    %v572 = vmul.f32 %v568, 0.5
    %v573 = vtanh.pop %v572
    %v574 = vmul.f32 %v573, 0.5
    %v575 = vadd.f32 %v574, 0.5
    %v576 = vmul.f32 %v569, 0.5
    %v577 = vtanh.pop %v576
    %v578 = vmul.f32 %v577, 0.5
    %v579 = vadd.f32 %v578, 0.5
    %v580 = vtanh.pop %v570
    %v581 = vmul.f32 %v571, 0.5
    %v582 = vtanh.pop %v581
    %v583 = vmul.f32 %v582, 0.5
    %v584 = vadd.f32 %v583, 0.5
    %v585 = vmul.f32 %v579, 0.0
    %v586 = vmul.f32 %v575, %v580
    %v587 = vadd.f32 %v585, %v586
    %v588 = vtanh.pop %v587
    %v589 = vmul.f32 %v584, %v588
    %v590 = vpack.c.bf16 %v589, %v589
    %591 = vmatprep.subr.bf16.mxu0 %v423
    %592 = vmatpush1.bf16.msra.mxu0 %v422
    %593 = vmatprep.subr.bf16.mxu0 %v427
    %594 = vmatpush1.bf16.msra.mxu0 %v426
    %595 = vmatprep.subr.bf16.mxu0 %v431
    %596 = vmatpush1.bf16.msra.mxu0 %v430
    %597 = vmatprep.subr.bf16.mxu0 %v435
    %598 = vmatpush1.bf16.msra.mxu0 %v434
    %599 = vmatprep.subr.bf16.mxu0 %v439
    %600 = vmatpush1.bf16.msra.mxu0 %v438
    %601 = vmatprep.subr.bf16.mxu0 %v443
    %602 = vmatpush1.bf16.msra.mxu0 %v442
    %603 = vmatprep.subr.bf16.mxu0 %v447
    %604 = vmatpush1.bf16.msra.mxu0 %v446
    %605 = vmatprep.subr.bf16.mxu0 %v451
    %606 = vmatpush1.bf16.msra.mxu0 %v450
    %607 = vmatprep.subr.bf16.mxu0 0
    %608 = vmatpush1.bf16.msra.mxu0 0
    %609 = vmatprep.subr.bf16.mxu0 0
    %610 = vmatpush1.bf16.msra.mxu0 0
    %611 = vmatprep.subr.bf16.mxu0 0
    %612 = vmatpush1.bf16.msra.mxu0 0
    %613 = vmatprep.subr.bf16.mxu0 0
    %614 = vmatpush1.bf16.msra.mxu0 0
    %615 = vmatprep.subr.bf16.mxu0 0
    %616 = vmatpush1.bf16.msra.mxu0 0
    %617 = vmatprep.subr.bf16.mxu0 0
    %618 = vmatpush1.bf16.msra.mxu0 0
    %619 = vmatprep.subr.bf16.mxu0 0
    %620 = vmatpush1.bf16.msra.mxu0 0
    %621 = vmatprep.subr.bf16.mxu0 0
    %622 = vmatpush1.bf16.msra.mxu0 0
    %623 = vmatprep.mubr.bf16.mxu0 0
    %624 = vmatmul.mubr.bf16.gmra.mrb[0].mxu0 %v590
    %v625 = vpop.f32.mrb[0].mxu0
    %v626 = vadd.f32 0.0, %v625
    %v627 = vpop.f32.mrb[0].mxu0
    %v628 = vadd.f32 0.0, %v627
    %v629 = vpop.f32.mrb[0].mxu0
    %v630 = vpop.f32.mrb[0].mxu0
    %631 = vdwg.mxu0
    %632 = vmatprep.subr.bf16.mxu0 %v425
    %633 = vmatpush1.bf16.msra.mxu0 %v424
    %634 = vmatprep.subr.bf16.mxu0 %v429
    %635 = vmatpush1.bf16.msra.mxu0 %v428
    %636 = vmatprep.subr.bf16.mxu0 %v433
    %637 = vmatpush1.bf16.msra.mxu0 %v432
    %638 = vmatprep.subr.bf16.mxu0 %v437
    %639 = vmatpush1.bf16.msra.mxu0 %v436
    %640 = vmatprep.subr.bf16.mxu0 %v441
    %641 = vmatpush1.bf16.msra.mxu0 %v440
    %642 = vmatprep.subr.bf16.mxu0 %v445
    %643 = vmatpush1.bf16.msra.mxu0 %v444
    %644 = vmatprep.subr.bf16.mxu0 %v449
    %645 = vmatpush1.bf16.msra.mxu0 %v448
    %646 = vmatprep.subr.bf16.mxu0 %v453
    %647 = vmatpush1.bf16.msra.mxu0 %v452
    %648 = vmatprep.subr.bf16.mxu0 0
    %649 = vmatpush1.bf16.msra.mxu0 0
    %650 = vmatprep.subr.bf16.mxu0 0
    %651 = vmatpush1.bf16.msra.mxu0 0
    %652 = vmatprep.subr.bf16.mxu0 0
    %653 = vmatpush1.bf16.msra.mxu0 0
    %654 = vmatprep.subr.bf16.mxu0 0
    %655 = vmatpush1.bf16.msra.mxu0 0
    %656 = vmatprep.subr.bf16.mxu0 0
    %657 = vmatpush1.bf16.msra.mxu0 0
    %658 = vmatprep.subr.bf16.mxu0 0
    %659 = vmatpush1.bf16.msra.mxu0 0
    %660 = vmatprep.subr.bf16.mxu0 0
    %661 = vmatpush1.bf16.msra.mxu0 0
    %662 = vmatprep.subr.bf16.mxu0 0
    %663 = vmatpush1.bf16.msra.mxu0 0
    %664 = vmatprep.mubr.bf16.mxu0 0
    %665 = vmatmul.mubr.bf16.gmra.mrb[0].mxu0 %v590
    %v666 = vpop.f32.mrb[0].mxu0
    %v667 = vadd.f32 0.0, %v666
    %v668 = vpop.f32.mrb[0].mxu0
    %v669 = vadd.f32 0.0, %v668
    %v670 = vpop.f32.mrb[0].mxu0
    %v671 = vpop.f32.mrb[0].mxu0
    %672 = vdwg.mxu0
    %v673 = vadd.f32 %v187, %v626
    %v674 = vadd.f32 %v189, %v628
    %v675 = vadd.f32 %v260, %v667
    %v676 = vadd.f32 %v262, %v669
    %v677 = vmul.f32 %v673, 0.5
    %v678 = vtanh.pop %v677
    %v679 = vmul.f32 %v678, 0.5
    %v680 = vadd.f32 %v679, 0.5
    %v681 = vmul.f32 %v674, 0.5
    %v682 = vtanh.pop %v681
    %v683 = vmul.f32 %v682, 0.5
    %v684 = vadd.f32 %v683, 0.5
    %v685 = vtanh.pop %v675
    %v686 = vmul.f32 %v676, 0.5
    %v687 = vtanh.pop %v686
    %v688 = vmul.f32 %v687, 0.5
    %v689 = vadd.f32 %v688, 0.5
    %v690 = vmul.f32 %v684, %v587
    %v691 = vmul.f32 %v680, %v685
    %v692 = vadd.f32 %v690, %v691
    %v693 = vtanh.pop %v692
    %v694 = vmul.f32 %v689, %v693
    %v695 = vpack.c.bf16 %v694, %v694
    %696 = vmatprep.subr.bf16.mxu0 %v423
    %697 = vmatpush1.bf16.msra.mxu0 %v422
    %698 = vmatprep.subr.bf16.mxu0 %v427
    %699 = vmatpush1.bf16.msra.mxu0 %v426
    %700 = vmatprep.subr.bf16.mxu0 %v431
    %701 = vmatpush1.bf16.msra.mxu0 %v430
    %702 = vmatprep.subr.bf16.mxu0 %v435
    %703 = vmatpush1.bf16.msra.mxu0 %v434
    %704 = vmatprep.subr.bf16.mxu0 %v439
    %705 = vmatpush1.bf16.msra.mxu0 %v438
    %706 = vmatprep.subr.bf16.mxu0 %v443
    %707 = vmatpush1.bf16.msra.mxu0 %v442
    %708 = vmatprep.subr.bf16.mxu0 %v447
    %709 = vmatpush1.bf16.msra.mxu0 %v446
    %710 = vmatprep.subr.bf16.mxu0 %v451
    %711 = vmatpush1.bf16.msra.mxu0 %v450
    %712 = vmatprep.subr.bf16.mxu0 0
    %713 = vmatpush1.bf16.msra.mxu0 0
    %714 = vmatprep.subr.bf16.mxu0 0
    %715 = vmatpush1.bf16.msra.mxu0 0
    %716 = vmatprep.subr.bf16.mxu0 0
    %717 = vmatpush1.bf16.msra.mxu0 0
    %718 = vmatprep.subr.bf16.mxu0 0
    %719 = vmatpush1.bf16.msra.mxu0 0
    %720 = vmatprep.subr.bf16.mxu0 0
    %721 = vmatpush1.bf16.msra.mxu0 0
    %722 = vmatprep.subr.bf16.mxu0 0
    %723 = vmatpush1.bf16.msra.mxu0 0
    %724 = vmatprep.subr.bf16.mxu0 0
    %725 = vmatpush1.bf16.msra.mxu0 0
    %726 = vmatprep.subr.bf16.mxu0 0
    %727 = vmatpush1.bf16.msra.mxu0 0
    %728 = vmatprep.mubr.bf16.mxu0 0
    %729 = vmatmul.mubr.bf16.gmra.mrb[0].mxu0 %v695
    %v730 = vpop.f32.mrb[0].mxu0
    %v731 = vadd.f32 0.0, %v730
    %v732 = vpop.f32.mrb[0].mxu0
    %v733 = vadd.f32 0.0, %v732
    %v734 = vpop.f32.mrb[0].mxu0
    %v735 = vpop.f32.mrb[0].mxu0
    %736 = vdwg.mxu0
    %737 = vmatprep.subr.bf16.mxu0 %v425
    %738 = vmatpush1.bf16.msra.mxu0 %v424
    %739 = vmatprep.subr.bf16.mxu0 %v429
    %740 = vmatpush1.bf16.msra.mxu0 %v428
    %741 = vmatprep.subr.bf16.mxu0 %v433
    %742 = vmatpush1.bf16.msra.mxu0 %v432
    %743 = vmatprep.subr.bf16.mxu0 %v437
    %744 = vmatpush1.bf16.msra.mxu0 %v436
    %745 = vmatprep.subr.bf16.mxu0 %v441
    %746 = vmatpush1.bf16.msra.mxu0 %v440
    %747 = vmatprep.subr.bf16.mxu0 %v445
    %748 = vmatpush1.bf16.msra.mxu0 %v444
    %749 = vmatprep.subr.bf16.mxu0 %v449
    %750 = vmatpush1.bf16.msra.mxu0 %v448
    %751 = vmatprep.subr.bf16.mxu0 %v453
    %752 = vmatpush1.bf16.msra.mxu0 %v452
    %753 = vmatprep.subr.bf16.mxu0 0
    %754 = vmatpush1.bf16.msra.mxu0 0
    %755 = vmatprep.subr.bf16.mxu0 0
    %756 = vmatpush1.bf16.msra.mxu0 0
    %757 = vmatprep.subr.bf16.mxu0 0
    %758 = vmatpush1.bf16.msra.mxu0 0
    %759 = vmatprep.subr.bf16.mxu0 0
    %760 = vmatpush1.bf16.msra.mxu0 0
    %761 = vmatprep.subr.bf16.mxu0 0
    %762 = vmatpush1.bf16.msra.mxu0 0
    %763 = vmatprep.subr.bf16.mxu0 0
    %764 = vmatpush1.bf16.msra.mxu0 0
    %765 = vmatprep.subr.bf16.mxu0 0
    %766 = vmatpush1.bf16.msra.mxu0 0
    %767 = vmatprep.subr.bf16.mxu0 0
    %768 = vmatpush1.bf16.msra.mxu0 0
    %769 = vmatprep.mubr.bf16.mxu0 0
    %770 = vmatmul.mubr.bf16.gmra.mrb[0].mxu0 %v695
    %v771 = vpop.f32.mrb[0].mxu0
    %v772 = vadd.f32 0.0, %v771
    %v773 = vpop.f32.mrb[0].mxu0
    %v774 = vadd.f32 0.0, %v773
    %v775 = vpop.f32.mrb[0].mxu0
    %v776 = vpop.f32.mrb[0].mxu0
    %777 = vdwg.mxu0
    %v778 = vadd.f32 %v193, %v731
    %v779 = vadd.f32 %v195, %v733
    %v780 = vadd.f32 %v266, %v772
    %v781 = vadd.f32 %v268, %v774
    %v782 = vmul.f32 %v778, 0.5
    %v783 = vtanh.pop %v782
    %v784 = vmul.f32 %v783, 0.5
    %v785 = vadd.f32 %v784, 0.5
    %v786 = vmul.f32 %v779, 0.5
    %v787 = vtanh.pop %v786
    %v788 = vmul.f32 %v787, 0.5
    %v789 = vadd.f32 %v788, 0.5
    %v790 = vtanh.pop %v780
    %v791 = vmul.f32 %v781, 0.5
    %v792 = vtanh.pop %v791
    %v793 = vmul.f32 %v792, 0.5
    %v794 = vadd.f32 %v793, 0.5
    %v795 = vmul.f32 %v789, %v692
    %v796 = vmul.f32 %v785, %v790
    %v797 = vadd.f32 %v795, %v796
    %v798 = vtanh.pop %v797
    %v799 = vmul.f32 %v794, %v798
    %v800 = vpack.c.bf16 %v799, %v799
    %801 = vmatprep.subr.bf16.mxu0 %v423
    %802 = vmatpush1.bf16.msra.mxu0 %v422
    %803 = vmatprep.subr.bf16.mxu0 %v427
    %804 = vmatpush1.bf16.msra.mxu0 %v426
    %805 = vmatprep.subr.bf16.mxu0 %v431
    %806 = vmatpush1.bf16.msra.mxu0 %v430
    %807 = vmatprep.subr.bf16.mxu0 %v435
    %808 = vmatpush1.bf16.msra.mxu0 %v434
    %809 = vmatprep.subr.bf16.mxu0 %v439
    %810 = vmatpush1.bf16.msra.mxu0 %v438
    %811 = vmatprep.subr.bf16.mxu0 %v443
    %812 = vmatpush1.bf16.msra.mxu0 %v442
    %813 = vmatprep.subr.bf16.mxu0 %v447
    %814 = vmatpush1.bf16.msra.mxu0 %v446
    %815 = vmatprep.subr.bf16.mxu0 %v451
    %816 = vmatpush1.bf16.msra.mxu0 %v450
    %817 = vmatprep.subr.bf16.mxu0 0
    %818 = vmatpush1.bf16.msra.mxu0 0
    %819 = vmatprep.subr.bf16.mxu0 0
    %820 = vmatpush1.bf16.msra.mxu0 0
    %821 = vmatprep.subr.bf16.mxu0 0
    %822 = vmatpush1.bf16.msra.mxu0 0
    %823 = vmatprep.subr.bf16.mxu0 0
    %824 = vmatpush1.bf16.msra.mxu0 0
    %825 = vmatprep.subr.bf16.mxu0 0
    %826 = vmatpush1.bf16.msra.mxu0 0
    %827 = vmatprep.subr.bf16.mxu0 0
    %828 = vmatpush1.bf16.msra.mxu0 0
    %829 = vmatprep.subr.bf16.mxu0 0
    %830 = vmatpush1.bf16.msra.mxu0 0
    %831 = vmatprep.subr.bf16.mxu0 0
    %832 = vmatpush1.bf16.msra.mxu0 0
    %833 = vmatprep.mubr.bf16.mxu0 0
    %834 = vmatmul.mubr.bf16.gmra.mrb[0].mxu0 %v800
    %v835 = vpop.f32.mrb[0].mxu0
    %v836 = vadd.f32 0.0, %v835
    %v837 = vpop.f32.mrb[0].mxu0
    %v838 = vadd.f32 0.0, %v837
    %v839 = vpop.f32.mrb[0].mxu0
    %v840 = vpop.f32.mrb[0].mxu0
    %841 = vdwg.mxu0
    %842 = vmatprep.subr.bf16.mxu0 %v425
    %843 = vmatpush1.bf16.msra.mxu0 %v424
    %844 = vmatprep.subr.bf16.mxu0 %v429
    %845 = vmatpush1.bf16.msra.mxu0 %v428
    %846 = vmatprep.subr.bf16.mxu0 %v433
    %847 = vmatpush1.bf16.msra.mxu0 %v432
    %848 = vmatprep.subr.bf16.mxu0 %v437
    %849 = vmatpush1.bf16.msra.mxu0 %v436
    %850 = vmatprep.subr.bf16.mxu0 %v441
    %851 = vmatpush1.bf16.msra.mxu0 %v440
    %852 = vmatprep.subr.bf16.mxu0 %v445
    %853 = vmatpush1.bf16.msra.mxu0 %v444
    %854 = vmatprep.subr.bf16.mxu0 %v449
    %855 = vmatpush1.bf16.msra.mxu0 %v448
    %856 = vmatprep.subr.bf16.mxu0 %v453
    %857 = vmatpush1.bf16.msra.mxu0 %v452
    %858 = vmatprep.subr.bf16.mxu0 0
    %859 = vmatpush1.bf16.msra.mxu0 0
    %860 = vmatprep.subr.bf16.mxu0 0
    %861 = vmatpush1.bf16.msra.mxu0 0
    %862 = vmatprep.subr.bf16.mxu0 0
    %863 = vmatpush1.bf16.msra.mxu0 0
    %864 = vmatprep.subr.bf16.mxu0 0
    %865 = vmatpush1.bf16.msra.mxu0 0
    %866 = vmatprep.subr.bf16.mxu0 0
    %867 = vmatpush1.bf16.msra.mxu0 0
    %868 = vmatprep.subr.bf16.mxu0 0
    %869 = vmatpush1.bf16.msra.mxu0 0
    %870 = vmatprep.subr.bf16.mxu0 0
    %871 = vmatpush1.bf16.msra.mxu0 0
    %872 = vmatprep.subr.bf16.mxu0 0
    %873 = vmatpush1.bf16.msra.mxu0 0
    %874 = vmatprep.mubr.bf16.mxu0 0
    %875 = vmatmul.mubr.bf16.gmra.mrb[0].mxu0 %v800
    %v876 = vpop.f32.mrb[0].mxu0
    %v877 = vadd.f32 0.0, %v876
    %v878 = vpop.f32.mrb[0].mxu0
    %v879 = vadd.f32 0.0, %v878
    %v880 = vpop.f32.mrb[0].mxu0
    %v881 = vpop.f32.mrb[0].mxu0
    %882 = vdwg.mxu0
    %v883 = vadd.f32 %v197, %v836
    %v884 = vadd.f32 %v199, %v838
    %v885 = vadd.f32 %v270, %v877
    %v886 = vadd.f32 %v272, %v879
    %v887 = vmul.f32 %v883, 0.5
    %v888 = vtanh.pop %v887
    %v889 = vmul.f32 %v888, 0.5
    %v890 = vadd.f32 %v889, 0.5
    %v891 = vmul.f32 %v884, 0.5
    %v892 = vtanh.pop %v891
    %v893 = vmul.f32 %v892, 0.5
    %v894 = vadd.f32 %v893, 0.5
    %v895 = vtanh.pop %v885
    %v896 = vmul.f32 %v886, 0.5
    %v897 = vtanh.pop %v896
    %v898 = vmul.f32 %v897, 0.5
    %v899 = vadd.f32 %v898, 0.5
    %v900 = vmul.f32 %v894, %v797
    %v901 = vmul.f32 %v890, %v895
    %v902 = vadd.f32 %v900, %v901
    %v903 = vtanh.pop %v902
    %v904 = vmul.f32 %v899, %v903
    %v905 = vpack.c.bf16 %v904, %v904
    %906 = vmatprep.subr.bf16.mxu0 %v423
    %907 = vmatpush1.bf16.msra.mxu0 %v422
    %908 = vmatprep.subr.bf16.mxu0 %v427
    %909 = vmatpush1.bf16.msra.mxu0 %v426
    %910 = vmatprep.subr.bf16.mxu0 %v431
    %911 = vmatpush1.bf16.msra.mxu0 %v430
    %912 = vmatprep.subr.bf16.mxu0 %v435
    %913 = vmatpush1.bf16.msra.mxu0 %v434
    %914 = vmatprep.subr.bf16.mxu0 %v439
    %915 = vmatpush1.bf16.msra.mxu0 %v438
    %916 = vmatprep.subr.bf16.mxu0 %v443
    %917 = vmatpush1.bf16.msra.mxu0 %v442
    %918 = vmatprep.subr.bf16.mxu0 %v447
    %919 = vmatpush1.bf16.msra.mxu0 %v446
    %920 = vmatprep.subr.bf16.mxu0 %v451
    %921 = vmatpush1.bf16.msra.mxu0 %v450
    %922 = vmatprep.subr.bf16.mxu0 0
    %923 = vmatpush1.bf16.msra.mxu0 0
    %924 = vmatprep.subr.bf16.mxu0 0
    %925 = vmatpush1.bf16.msra.mxu0 0
    %926 = vmatprep.subr.bf16.mxu0 0
    %927 = vmatpush1.bf16.msra.mxu0 0
    %928 = vmatprep.subr.bf16.mxu0 0
    %929 = vmatpush1.bf16.msra.mxu0 0
    %930 = vmatprep.subr.bf16.mxu0 0
    %931 = vmatpush1.bf16.msra.mxu0 0
    %932 = vmatprep.subr.bf16.mxu0 0
    %933 = vmatpush1.bf16.msra.mxu0 0
    %934 = vmatprep.subr.bf16.mxu0 0
    %935 = vmatpush1.bf16.msra.mxu0 0
    %936 = vmatprep.subr.bf16.mxu0 0
    %937 = vmatpush1.bf16.msra.mxu0 0
    %938 = vmatprep.mubr.bf16.mxu0 0
    %939 = vmatmul.mubr.bf16.gmra.mrb[0].mxu0 %v905
    %v940 = vpop.f32.mrb[0].mxu0
    %v941 = vadd.f32 0.0, %v940
    %v942 = vpop.f32.mrb[0].mxu0
    %v943 = vadd.f32 0.0, %v942
    %v944 = vpop.f32.mrb[0].mxu0
    %v945 = vpop.f32.mrb[0].mxu0
    %946 = vdwg.mxu0
    %947 = vmatprep.subr.bf16.mxu0 %v425
    %948 = vmatpush1.bf16.msra.mxu0 %v424
    %949 = vmatprep.subr.bf16.mxu0 %v429
    %950 = vmatpush1.bf16.msra.mxu0 %v428
    %951 = vmatprep.subr.bf16.mxu0 %v433
    %952 = vmatpush1.bf16.msra.mxu0 %v432
    %953 = vmatprep.subr.bf16.mxu0 %v437
    %954 = vmatpush1.bf16.msra.mxu0 %v436
    %955 = vmatprep.subr.bf16.mxu0 %v441
    %956 = vmatpush1.bf16.msra.mxu0 %v440
    %957 = vmatprep.subr.bf16.mxu0 %v445
    %958 = vmatpush1.bf16.msra.mxu0 %v444
    %959 = vmatprep.subr.bf16.mxu0 %v449
    %960 = vmatpush1.bf16.msra.mxu0 %v448
    %961 = vmatprep.subr.bf16.mxu0 %v453
    %962 = vmatpush1.bf16.msra.mxu0 %v452
    %963 = vmatprep.subr.bf16.mxu0 0
    %964 = vmatpush1.bf16.msra.mxu0 0
    %965 = vmatprep.subr.bf16.mxu0 0
    %966 = vmatpush1.bf16.msra.mxu0 0
    %967 = vmatprep.subr.bf16.mxu0 0
    %968 = vmatpush1.bf16.msra.mxu0 0
    %969 = vmatprep.subr.bf16.mxu0 0
    %970 = vmatpush1.bf16.msra.mxu0 0
    %971 = vmatprep.subr.bf16.mxu0 0
    %972 = vmatpush1.bf16.msra.mxu0 0
    %973 = vmatprep.subr.bf16.mxu0 0
    %974 = vmatpush1.bf16.msra.mxu0 0
    %975 = vmatprep.subr.bf16.mxu0 0
    %976 = vmatpush1.bf16.msra.mxu0 0
    %977 = vmatprep.subr.bf16.mxu0 0
    %978 = vmatpush1.bf16.msra.mxu0 0
    %979 = vmatprep.mubr.bf16.mxu0 0
    %980 = vmatmul.mubr.bf16.gmra.mrb[0].mxu0 %v905
    %v981 = vpop.f32.mrb[0].mxu0
    %v982 = vadd.f32 0.0, %v981
    %v983 = vpop.f32.mrb[0].mxu0
    %v984 = vadd.f32 0.0, %v983
    %v985 = vpop.f32.mrb[0].mxu0
    %v986 = vpop.f32.mrb[0].mxu0
    %987 = vdwg.mxu0
    %v988 = vadd.f32 %v203, %v941
    %v989 = vadd.f32 %v205, %v943
    %v990 = vadd.f32 %v276, %v982
    %v991 = vadd.f32 %v278, %v984
    %v992 = vmul.f32 %v988, 0.5
    %v993 = vtanh.pop %v992
    %v994 = vmul.f32 %v993, 0.5
    %v995 = vadd.f32 %v994, 0.5
    %v996 = vmul.f32 %v989, 0.5
    %v997 = vtanh.pop %v996
    %v998 = vmul.f32 %v997, 0.5
    %v999 = vadd.f32 %v998, 0.5
    %v1000 = vtanh.pop %v990
    %v1001 = vmul.f32 %v991, 0.5
    %v1002 = vtanh.pop %v1001
    %v1003 = vmul.f32 %v1002, 0.5
    %v1004 = vadd.f32 %v1003, 0.5
    %v1005 = vmul.f32 %v999, %v902
    %v1006 = vmul.f32 %v995, %v1000
    %v1007 = vadd.f32 %v1005, %v1006
    %v1008 = vtanh.pop %v1007
    %v1009 = vmul.f32 %v1004, %v1008
    %v1010 = vpack.c.bf16 %v1009, %v1009
    %1011 = vmatprep.subr.bf16.mxu0 %v423
    %1012 = vmatpush1.bf16.msra.mxu0 %v422
    %1013 = vmatprep.subr.bf16.mxu0 %v427
    %1014 = vmatpush1.bf16.msra.mxu0 %v426
    %1015 = vmatprep.subr.bf16.mxu0 %v431
    %1016 = vmatpush1.bf16.msra.mxu0 %v430
    %1017 = vmatprep.subr.bf16.mxu0 %v435
    %1018 = vmatpush1.bf16.msra.mxu0 %v434
    %1019 = vmatprep.subr.bf16.mxu0 %v439
    %1020 = vmatpush1.bf16.msra.mxu0 %v438
    %1021 = vmatprep.subr.bf16.mxu0 %v443
    %1022 = vmatpush1.bf16.msra.mxu0 %v442
    %1023 = vmatprep.subr.bf16.mxu0 %v447
    %1024 = vmatpush1.bf16.msra.mxu0 %v446
    %1025 = vmatprep.subr.bf16.mxu0 %v451
    %1026 = vmatpush1.bf16.msra.mxu0 %v450
    %1027 = vmatprep.subr.bf16.mxu0 0
    %1028 = vmatpush1.bf16.msra.mxu0 0
    %1029 = vmatprep.subr.bf16.mxu0 0
    %1030 = vmatpush1.bf16.msra.mxu0 0
    %1031 = vmatprep.subr.bf16.mxu0 0
    %1032 = vmatpush1.bf16.msra.mxu0 0
    %1033 = vmatprep.subr.bf16.mxu0 0
    %1034 = vmatpush1.bf16.msra.mxu0 0
    %1035 = vmatprep.subr.bf16.mxu0 0
    %1036 = vmatpush1.bf16.msra.mxu0 0
    %1037 = vmatprep.subr.bf16.mxu0 0
    %1038 = vmatpush1.bf16.msra.mxu0 0
    %1039 = vmatprep.subr.bf16.mxu0 0
    %1040 = vmatpush1.bf16.msra.mxu0 0
    %1041 = vmatprep.subr.bf16.mxu0 0
    %1042 = vmatpush1.bf16.msra.mxu0 0
    %1043 = vmatprep.mubr.bf16.mxu0 0
    %1044 = vmatmul.mubr.bf16.gmra.mrb[0].mxu0 %v1010
    %v1045 = vpop.f32.mrb[0].mxu0
    %v1046 = vadd.f32 0.0, %v1045
    %v1047 = vpop.f32.mrb[0].mxu0
    %v1048 = vadd.f32 0.0, %v1047
    %v1049 = vpop.f32.mrb[0].mxu0
    %v1050 = vpop.f32.mrb[0].mxu0
    %1051 = vdwg.mxu0
    %1052 = vmatprep.subr.bf16.mxu0 %v425
    %1053 = vmatpush1.bf16.msra.mxu0 %v424
    %1054 = vmatprep.subr.bf16.mxu0 %v429
    %1055 = vmatpush1.bf16.msra.mxu0 %v428
    %1056 = vmatprep.subr.bf16.mxu0 %v433
    %1057 = vmatpush1.bf16.msra.mxu0 %v432
    %1058 = vmatprep.subr.bf16.mxu0 %v437
    %1059 = vmatpush1.bf16.msra.mxu0 %v436
    %1060 = vmatprep.subr.bf16.mxu0 %v441
    %1061 = vmatpush1.bf16.msra.mxu0 %v440
    %1062 = vmatprep.subr.bf16.mxu0 %v445
    %1063 = vmatpush1.bf16.msra.mxu0 %v444
    %1064 = vmatprep.subr.bf16.mxu0 %v449
    %1065 = vmatpush1.bf16.msra.mxu0 %v448
    %1066 = vmatprep.subr.bf16.mxu0 %v453
    %1067 = vmatpush1.bf16.msra.mxu0 %v452
    %1068 = vmatprep.subr.bf16.mxu0 0
    %1069 = vmatpush1.bf16.msra.mxu0 0
    %1070 = vmatprep.subr.bf16.mxu0 0
    %1071 = vmatpush1.bf16.msra.mxu0 0
    %1072 = vmatprep.subr.bf16.mxu0 0
    %1073 = vmatpush1.bf16.msra.mxu0 0
    %1074 = vmatprep.subr.bf16.mxu0 0
    %1075 = vmatpush1.bf16.msra.mxu0 0
    %1076 = vmatprep.subr.bf16.mxu0 0
    %1077 = vmatpush1.bf16.msra.mxu0 0
    %1078 = vmatprep.subr.bf16.mxu0 0
    %1079 = vmatpush1.bf16.msra.mxu0 0
    %1080 = vmatprep.subr.bf16.mxu0 0
    %1081 = vmatpush1.bf16.msra.mxu0 0
    %1082 = vmatprep.subr.bf16.mxu0 0
    %1083 = vmatpush1.bf16.msra.mxu0 0
    %1084 = vmatprep.mubr.bf16.mxu0 0
    %1085 = vmatmul.mubr.bf16.gmra.mrb[0].mxu0 %v1010
    %v1086 = vpop.f32.mrb[0].mxu0
    %v1087 = vadd.f32 0.0, %v1086
    %v1088 = vpop.f32.mrb[0].mxu0
    %v1089 = vadd.f32 0.0, %v1088
    %v1090 = vpop.f32.mrb[0].mxu0
    %v1091 = vpop.f32.mrb[0].mxu0
    %1092 = vdwg.mxu0
    %v1093 = vadd.f32 %v207, %v1046
    %v1094 = vadd.f32 %v209, %v1048
    %v1095 = vadd.f32 %v280, %v1087
    %v1096 = vadd.f32 %v282, %v1089
    %v1097 = vmul.f32 %v1093, 0.5
    %v1098 = vtanh.pop %v1097
    %v1099 = vmul.f32 %v1098, 0.5
    %v1100 = vadd.f32 %v1099, 0.5
    %v1101 = vmul.f32 %v1094, 0.5
    %v1102 = vtanh.pop %v1101
    %v1103 = vmul.f32 %v1102, 0.5
    %v1104 = vadd.f32 %v1103, 0.5
    %v1105 = vtanh.pop %v1095
    %v1106 = vmul.f32 %v1096, 0.5
    %v1107 = vtanh.pop %v1106
    %v1108 = vmul.f32 %v1107, 0.5
    %v1109 = vadd.f32 %v1108, 0.5
    %v1110 = vmul.f32 %v1104, %v1007
    %v1111 = vmul.f32 %v1100, %v1105
    %v1112 = vadd.f32 %v1110, %v1111
    %v1113 = vtanh.pop %v1112
    %v1114 = vmul.f32 %v1109, %v1113
    %v1115 = vpack.c.bf16 %v1114, %v1114
    %1116 = vmatprep.subr.bf16.mxu0 %v423
    %1117 = vmatpush1.bf16.msra.mxu0 %v422
    %1118 = vmatprep.subr.bf16.mxu0 %v427
    %1119 = vmatpush1.bf16.msra.mxu0 %v426
    %1120 = vmatprep.subr.bf16.mxu0 %v431
    %1121 = vmatpush1.bf16.msra.mxu0 %v430
    %1122 = vmatprep.subr.bf16.mxu0 %v435
    %1123 = vmatpush1.bf16.msra.mxu0 %v434
    %1124 = vmatprep.subr.bf16.mxu0 %v439
    %1125 = vmatpush1.bf16.msra.mxu0 %v438
    %1126 = vmatprep.subr.bf16.mxu0 %v443
    %1127 = vmatpush1.bf16.msra.mxu0 %v442
    %1128 = vmatprep.subr.bf16.mxu0 %v447
    %1129 = vmatpush1.bf16.msra.mxu0 %v446
    %1130 = vmatprep.subr.bf16.mxu0 %v451
    %1131 = vmatpush1.bf16.msra.mxu0 %v450
    %1132 = vmatprep.subr.bf16.mxu0 0
    %1133 = vmatpush1.bf16.msra.mxu0 0
    %1134 = vmatprep.subr.bf16.mxu0 0
    %1135 = vmatpush1.bf16.msra.mxu0 0
    %1136 = vmatprep.subr.bf16.mxu0 0
    %1137 = vmatpush1.bf16.msra.mxu0 0
    %1138 = vmatprep.subr.bf16.mxu0 0
    %1139 = vmatpush1.bf16.msra.mxu0 0
    %1140 = vmatprep.subr.bf16.mxu0 0
    %1141 = vmatpush1.bf16.msra.mxu0 0
    %1142 = vmatprep.subr.bf16.mxu0 0
    %1143 = vmatpush1.bf16.msra.mxu0 0
    %1144 = vmatprep.subr.bf16.mxu0 0
    %1145 = vmatpush1.bf16.msra.mxu0 0
    %1146 = vmatprep.subr.bf16.mxu0 0
    %1147 = vmatpush1.bf16.msra.mxu0 0
    %1148 = vmatprep.mubr.bf16.mxu0 0
    %1149 = vmatmul.mubr.bf16.gmra.mrb[0].mxu0 %v1115
    %v1150 = vpop.f32.mrb[0].mxu0
    %v1151 = vadd.f32 0.0, %v1150
    %v1152 = vpop.f32.mrb[0].mxu0
    %v1153 = vadd.f32 0.0, %v1152
    %v1154 = vpop.f32.mrb[0].mxu0
    %v1155 = vpop.f32.mrb[0].mxu0
    %1156 = vdwg.mxu0
    %1157 = vmatprep.subr.bf16.mxu0 %v425
    %1158 = vmatpush1.bf16.msra.mxu0 %v424
    %1159 = vmatprep.subr.bf16.mxu0 %v429
    %1160 = vmatpush1.bf16.msra.mxu0 %v428
    %1161 = vmatprep.subr.bf16.mxu0 %v433
    %1162 = vmatpush1.bf16.msra.mxu0 %v432
    %1163 = vmatprep.subr.bf16.mxu0 %v437
    %1164 = vmatpush1.bf16.msra.mxu0 %v436
    %1165 = vmatprep.subr.bf16.mxu0 %v441
    %1166 = vmatpush1.bf16.msra.mxu0 %v440
    %1167 = vmatprep.subr.bf16.mxu0 %v445
    %1168 = vmatpush1.bf16.msra.mxu0 %v444
    %1169 = vmatprep.subr.bf16.mxu0 %v449
    %1170 = vmatpush1.bf16.msra.mxu0 %v448
    %1171 = vmatprep.subr.bf16.mxu0 %v453
    %1172 = vmatpush1.bf16.msra.mxu0 %v452
    %1173 = vmatprep.subr.bf16.mxu0 0
    %1174 = vmatpush1.bf16.msra.mxu0 0
    %1175 = vmatprep.subr.bf16.mxu0 0
    %1176 = vmatpush1.bf16.msra.mxu0 0
    %1177 = vmatprep.subr.bf16.mxu0 0
    %1178 = vmatpush1.bf16.msra.mxu0 0
    %1179 = vmatprep.subr.bf16.mxu0 0
    %1180 = vmatpush1.bf16.msra.mxu0 0
    %1181 = vmatprep.subr.bf16.mxu0 0
    %1182 = vmatpush1.bf16.msra.mxu0 0
    %1183 = vmatprep.subr.bf16.mxu0 0
    %1184 = vmatpush1.bf16.msra.mxu0 0
    %1185 = vmatprep.subr.bf16.mxu0 0
    %1186 = vmatpush1.bf16.msra.mxu0 0
    %1187 = vmatprep.subr.bf16.mxu0 0
    %1188 = vmatpush1.bf16.msra.mxu0 0
    %1189 = vmatprep.mubr.bf16.mxu0 0
    %1190 = vmatmul.mubr.bf16.gmra.mrb[0].mxu0 %v1115
    %v1191 = vpop.f32.mrb[0].mxu0
    %v1192 = vadd.f32 0.0, %v1191
    %v1193 = vpop.f32.mrb[0].mxu0
    %v1194 = vadd.f32 0.0, %v1193
    %v1195 = vpop.f32.mrb[0].mxu0
    %v1196 = vpop.f32.mrb[0].mxu0
    %1197 = vdwg.mxu0
    %v1198 = vadd.f32 %v213, %v1151
    %v1199 = vadd.f32 %v215, %v1153
    %v1200 = vadd.f32 %v286, %v1192
    %v1201 = vadd.f32 %v288, %v1194
    %v1202 = vmul.f32 %v1198, 0.5
    %v1203 = vtanh.pop %v1202
    %v1204 = vmul.f32 %v1203, 0.5
    %v1205 = vadd.f32 %v1204, 0.5
    %v1206 = vmul.f32 %v1199, 0.5
    %v1207 = vtanh.pop %v1206
    %v1208 = vmul.f32 %v1207, 0.5
    %v1209 = vadd.f32 %v1208, 0.5
    %v1210 = vtanh.pop %v1200
    %v1211 = vmul.f32 %v1201, 0.5
    %v1212 = vtanh.pop %v1211
    %v1213 = vmul.f32 %v1212, 0.5
    %v1214 = vadd.f32 %v1213, 0.5
    %v1215 = vmul.f32 %v1209, %v1112
    %v1216 = vmul.f32 %v1205, %v1210
    %v1217 = vadd.f32 %v1215, %v1216
    %v1218 = vtanh.pop %v1217
    %v1219 = vmul.f32 %v1214, %v1218
    %v1220 = vpack.c.bf16 %v1219, %v1219
    %1221 = vmatprep.subr.bf16.mxu0 %v423
    %1222 = vmatpush1.bf16.msra.mxu0 %v422
    %1223 = vmatprep.subr.bf16.mxu0 %v427
    %1224 = vmatpush1.bf16.msra.mxu0 %v426
    %1225 = vmatprep.subr.bf16.mxu0 %v431
    %1226 = vmatpush1.bf16.msra.mxu0 %v430
    %1227 = vmatprep.subr.bf16.mxu0 %v435
    %1228 = vmatpush1.bf16.msra.mxu0 %v434
    %1229 = vmatprep.subr.bf16.mxu0 %v439
    %1230 = vmatpush1.bf16.msra.mxu0 %v438
    %1231 = vmatprep.subr.bf16.mxu0 %v443
    %1232 = vmatpush1.bf16.msra.mxu0 %v442
    %1233 = vmatprep.subr.bf16.mxu0 %v447
    %1234 = vmatpush1.bf16.msra.mxu0 %v446
    %1235 = vmatprep.subr.bf16.mxu0 %v451
    %1236 = vmatpush1.bf16.msra.mxu0 %v450
    %1237 = vmatprep.subr.bf16.mxu0 0
    %1238 = vmatpush1.bf16.msra.mxu0 0
    %1239 = vmatprep.subr.bf16.mxu0 0
    %1240 = vmatpush1.bf16.msra.mxu0 0
    %1241 = vmatprep.subr.bf16.mxu0 0
    %1242 = vmatpush1.bf16.msra.mxu0 0
    %1243 = vmatprep.subr.bf16.mxu0 0
    %1244 = vmatpush1.bf16.msra.mxu0 0
    %1245 = vmatprep.subr.bf16.mxu0 0
    %1246 = vmatpush1.bf16.msra.mxu0 0
    %1247 = vmatprep.subr.bf16.mxu0 0
    %1248 = vmatpush1.bf16.msra.mxu0 0
    %1249 = vmatprep.subr.bf16.mxu0 0
    %1250 = vmatpush1.bf16.msra.mxu0 0
    %1251 = vmatprep.subr.bf16.mxu0 0
    %1252 = vmatpush1.bf16.msra.mxu0 0
    %1253 = vmatprep.mubr.bf16.mxu0 0
    %1254 = vmatmul.mubr.bf16.gmra.mrb[0].mxu0 %v1220
    %v1255 = vpop.f32.mrb[0].mxu0
    %v1256 = vadd.f32 0.0, %v1255
    %v1257 = vpop.f32.mrb[0].mxu0
    %v1258 = vadd.f32 0.0, %v1257
    %v1259 = vpop.f32.mrb[0].mxu0
    %v1260 = vpop.f32.mrb[0].mxu0
    %1261 = vdwg.mxu0
    %1262 = vmatprep.subr.bf16.mxu0 %v425
    %1263 = vmatpush1.bf16.msra.mxu0 %v424
    %1264 = vmatprep.subr.bf16.mxu0 %v429
    %1265 = vmatpush1.bf16.msra.mxu0 %v428
    %1266 = vmatprep.subr.bf16.mxu0 %v433
    %1267 = vmatpush1.bf16.msra.mxu0 %v432
    %1268 = vmatprep.subr.bf16.mxu0 %v437
    %1269 = vmatpush1.bf16.msra.mxu0 %v436
    %1270 = vmatprep.subr.bf16.mxu0 %v441
    %1271 = vmatpush1.bf16.msra.mxu0 %v440
    %1272 = vmatprep.subr.bf16.mxu0 %v445
    %1273 = vmatpush1.bf16.msra.mxu0 %v444
    %1274 = vmatprep.subr.bf16.mxu0 %v449
    %1275 = vmatpush1.bf16.msra.mxu0 %v448
    %1276 = vmatprep.subr.bf16.mxu0 %v453
    %1277 = vmatpush1.bf16.msra.mxu0 %v452
    %1278 = vmatprep.subr.bf16.mxu0 0
    %1279 = vmatpush1.bf16.msra.mxu0 0
    %1280 = vmatprep.subr.bf16.mxu0 0
    %1281 = vmatpush1.bf16.msra.mxu0 0
    %1282 = vmatprep.subr.bf16.mxu0 0
    %1283 = vmatpush1.bf16.msra.mxu0 0
    %1284 = vmatprep.subr.bf16.mxu0 0
    %1285 = vmatpush1.bf16.msra.mxu0 0
    %1286 = vmatprep.subr.bf16.mxu0 0
    %1287 = vmatpush1.bf16.msra.mxu0 0
    %1288 = vmatprep.subr.bf16.mxu0 0
    %1289 = vmatpush1.bf16.msra.mxu0 0
    %1290 = vmatprep.subr.bf16.mxu0 0
    %1291 = vmatpush1.bf16.msra.mxu0 0
    %1292 = vmatprep.subr.bf16.mxu0 0
    %1293 = vmatpush1.bf16.msra.mxu0 0
    %1294 = vmatprep.mubr.bf16.mxu0 0
    %1295 = vmatmul.mubr.bf16.gmra.mrb[0].mxu0 %v1220
    %v1296 = vpop.f32.mrb[0].mxu0
    %v1297 = vadd.f32 0.0, %v1296
    %v1298 = vpop.f32.mrb[0].mxu0
    %v1299 = vadd.f32 0.0, %v1298
    %v1300 = vpop.f32.mrb[0].mxu0
    %v1301 = vpop.f32.mrb[0].mxu0
    %1302 = vdwg.mxu0
    %v1303 = vadd.f32 %v217, %v1256
    %v1304 = vadd.f32 %v219, %v1258
    %v1305 = vadd.f32 %v290, %v1297
    %v1306 = vadd.f32 %v292, %v1299
    %v1307 = vmul.f32 %v1303, 0.5
    %v1308 = vtanh.pop %v1307
    %v1309 = vmul.f32 %v1308, 0.5
    %v1310 = vadd.f32 %v1309, 0.5
    %v1311 = vmul.f32 %v1304, 0.5
    %v1312 = vtanh.pop %v1311
    %v1313 = vmul.f32 %v1312, 0.5
    %v1314 = vadd.f32 %v1313, 0.5
    %v1315 = vtanh.pop %v1305
    %v1316 = vmul.f32 %v1306, 0.5
    %v1317 = vtanh.pop %v1316
    %v1318 = vmul.f32 %v1317, 0.5
    %v1319 = vadd.f32 %v1318, 0.5
    %v1320 = vmul.f32 %v1314, %v1217
    %v1321 = vmul.f32 %v1310, %v1315
    %v1322 = vadd.f32 %v1320, %v1321
    %v1323 = vtanh.pop %v1322
    %v1324 = vmul.f32 %v1319, %v1323
    %v1325 = vlaneseq
    %v1326 = vand.u32 %v1325, 127
    %vm1327 = vcmp.eq.s32.totalorder %v1326, 127
    %v1328 = vsel %vm1327, 1.0, %v1324
    %v1329 = vld [vmem:[#allocation4] sm:$0xff]
    %v1330 = vld [vmem:[#allocation4 + $0x8] sm:$0xff]
    %v1331 = vld [vmem:[#allocation4 + $0x10] sm:$0xff]
    %v1332 = vld [vmem:[#allocation4 + $0x18] sm:$0xff]
    %v1333 = vld [vmem:[#allocation4 + $0x20] sm:$0xff]
    %v1334 = vld [vmem:[#allocation4 + $0x28] sm:$0xff]
    %v1335 = vld [vmem:[#allocation4 + $0x30] sm:$0xff]
    %v1336 = vld [vmem:[#allocation4 + $0x38] sm:$0xff]
    %v1337 = vld [vmem:[#allocation4 + $0x40] sm:$0xff]
    %v1338 = vld [vmem:[#allocation4 + $0x48] sm:$0xff]
    %v1339 = vld [vmem:[#allocation4 + $0x50] sm:$0xff]
    %v1340 = vld [vmem:[#allocation4 + $0x58] sm:$0xff]
    %v1341 = vld [vmem:[#allocation4 + $0x60] sm:$0xff]
    %v1342 = vld [vmem:[#allocation4 + $0x68] sm:$0xff]
    %v1343 = vld [vmem:[#allocation4 + $0x70] sm:$0xff]
    %v1344 = vld [vmem:[#allocation4 + $0x78] sm:$0xff]
    %1345 = vmatprep.subr.mxu0 0.0
    %1346 = vmatpush1.msra.mxu0 %v1329
    %1347 = vmatprep.subr.mxu0 0.0
    %1348 = vmatpush1.msra.mxu0 %v1330
    %1349 = vmatprep.subr.mxu0 0.0
    %1350 = vmatpush1.msra.mxu0 %v1331
    %1351 = vmatprep.subr.mxu0 0.0
    %1352 = vmatpush1.msra.mxu0 %v1332
    %1353 = vmatprep.subr.mxu0 0.0
    %1354 = vmatpush1.msra.mxu0 %v1333
    %1355 = vmatprep.subr.mxu0 0.0
    %1356 = vmatpush1.msra.mxu0 %v1334
    %1357 = vmatprep.subr.mxu0 0.0
    %1358 = vmatpush1.msra.mxu0 %v1335
    %1359 = vmatprep.subr.mxu0 0.0
    %1360 = vmatpush1.msra.mxu0 %v1336
    %1361 = vmatprep.subr.mxu0 0.0
    %1362 = vmatpush1.msra.mxu0 %v1337
    %1363 = vmatprep.subr.mxu0 0.0
    %1364 = vmatpush1.msra.mxu0 %v1338
    %1365 = vmatprep.subr.mxu0 0.0
    %1366 = vmatpush1.msra.mxu0 %v1339
    %1367 = vmatprep.subr.mxu0 0.0
    %1368 = vmatpush1.msra.mxu0 %v1340
    %1369 = vmatprep.subr.mxu0 0.0
    %1370 = vmatpush1.msra.mxu0 %v1341
    %1371 = vmatprep.subr.mxu0 0.0
    %1372 = vmatpush1.msra.mxu0 %v1342
    %1373 = vmatprep.subr.mxu0 0.0
    %1374 = vmatpush1.msra.mxu0 %v1343
    %1375 = vmatprep.subr.mxu0 0.0
    %1376 = vmatpush1.msra.mxu0 %v1344
    %1377 = vmatprep.subr.mxu0 0.0
    %1378 = vmatpush1.msra.mxu0 0.0
    %1379 = vmatprep.subr.mxu0 0.0
    %1380 = vmatpush1.msra.mxu0 0.0
    %1381 = vmatprep.subr.mxu0 0.0
    %1382 = vmatpush1.msra.mxu0 0.0
    %1383 = vmatprep.subr.mxu0 0.0
    %1384 = vmatpush1.msra.mxu0 0.0
    %1385 = vmatprep.subr.mxu0 0.0
    %1386 = vmatpush1.msra.mxu0 0.0
    %1387 = vmatprep.subr.mxu0 0.0
    %1388 = vmatpush1.msra.mxu0 0.0
    %1389 = vmatprep.subr.mxu0 0.0
    %1390 = vmatpush1.msra.mxu0 0.0
    %1391 = vmatprep.subr.mxu0 0.0
    %1392 = vmatpush1.msra.mxu0 0.0
    %1393 = vmatprep.subr.mxu0 0.0
    %1394 = vmatpush1.msra.mxu0 0.0
    %1395 = vmatprep.subr.mxu0 0.0
    %1396 = vmatpush1.msra.mxu0 0.0
    %1397 = vmatprep.subr.mxu0 0.0
    %1398 = vmatpush1.msra.mxu0 0.0
    %1399 = vmatprep.subr.mxu0 0.0
    %1400 = vmatpush1.msra.mxu0 0.0
    %1401 = vmatprep.subr.mxu0 0.0
    %1402 = vmatpush1.msra.mxu0 0.0
    %1403 = vmatprep.subr.mxu0 0.0
    %1404 = vmatpush1.msra.mxu0 0.0
    %1405 = vmatprep.subr.mxu0 0.0
    %1406 = vmatpush1.msra.mxu0 0.0
    %1407 = vmatprep.subr.mxu0 0.0
    %1408 = vmatpush1.msra.mxu0 0.0
    %1409 = vmatprep.mubr.f32.mxu0 0.0
    %1410 = vmatmul.mubr.f32.gmra.mrb[0].mxu0 %v1328
    %v1411 = vpop.f32.mrb[0].mxu0
    %v1412 = vadd.f32 0.0, %v1411
    %v1413 = vpop.f32.mrb[0].mxu0
    %1414 = vdwg.mxu0
    %v1415 = vld [vmem:[%s5] sm:$0x1]
    %v1417 = vlaneseq
    %v1418 = vshrl.u32 %v1417, 7
    %v1419 = vsub.s32 0, %v1418
    %v1420 = vrot.slane %v1415, %v1419
    %v1422 = vmul.f32 %v1412, %v1420
    %1423 = vadd.xlane.f32.xlu0 %v1422
    %v1424 = vpop.xlane.xlu0 %1423
    %vm1425 = vcmp.eq.s32.totalorder %v1326, 20
    %v1426 = vsel %vm1425, %v1424, %v1412
    %1427 = vst [vmem:[%s6] sm:$0xff] %v1426
    // Predicated region
    $region34: #{lstm_model_forward.1} parent=1 // pred_check
      _
    $region35: #{lstm_model_forward.1} parent=1 // pred_check_branch
      %1429 = sbr.rel (0) target = $region37
    $region36: #{lstm_model_forward.1} parent=1 // pred_region
      _
    $region37: #{lstm_model_forward.1} parent=1 // pred_fallthru
      _
    // Predicated region
    $region38: #{lstm_model_forward.1} parent=1 // pred_check
      _
    $region39: #{lstm_model_forward.1} parent=1 // pred_check_branch
      %1431 = sbr.rel (0) target = $region41
    $region40: #{lstm_model_forward.1} parent=1 // pred_region
      _
    $region41: #{lstm_model_forward.1} parent=1 // pred_fallthru
      _
    %1432 = vsyncpa [#allocation3], 1
    %1433 = vsyncpa [#allocation5], 1

</llo_original>
